<compile_context>
chip_gen: v7x
topology: tpu7x:2x2x1
jax: 0.10.0
libtpu: 0.0.40
codegen_flags: <defaults>
</compile_context>

<pallas_src>
import functools
import math

import jax
import jax.numpy as jnp
from jax.experimental import pallas as pl
from jax.experimental.pallas import tpu as pltpu


def mha_kernel(x_ref, wq_ref, bq_ref, wk_ref, bk_ref, wv_ref, bv_ref,
               wo_ref, bo_ref, o_ref, attn_ref, *, n_heads, seq_len,
               approx_reciprocal):
    """One grid step = one batch element, full (padded) sequence.

    Shapes inside the kernel:
      x_ref          : (1, S_pad, H)  bf16   input sequence (Q rows == K/V source)
      wq/wk/wv/wo_ref: (H, H)         bf16   full weight matrices (resident)
      bq/bk/bv/bo_ref: (1, H)         f32    biases (1/sqrt(d) folded into bq/wq)
      o_ref          : (1, S_pad, H)  x.dtype
      attn_ref       : (S_pad, H)     bf16   VMEM scratch (per-head attention, concat)
    """
    x = x_ref[0]                                    # (S_pad, H) bf16
    s_pad, hidden = x.shape
    d = hidden // n_heads

    # y = x @ W.T + b ; bf16 operands, f32 accumulation on the MXU (H-deep
    # contraction and H-wide output -> full MXU fill).
    def proj(w_ref, b_ref):
        y = jax.lax.dot_general(x, w_ref[...], (((1,), (1,)), ((), ())),
                                preferred_element_type=jnp.float32)
        return y + b_ref[...]

    q = proj(wq_ref, bq_ref)                        # (S_pad, H) f32, pre-scaled
    k = proj(wk_ref, bk_ref)                        # (S_pad, H) f32
    v = proj(wv_ref, bv_ref)                        # (S_pad, H) f32

    # Mask for padded key columns (static: seq_len / s_pad are trace-time).
    if seq_len < s_pad:
        key_idx = jax.lax.broadcasted_iota(jnp.int32, (1, s_pad), 1)
        key_mask = key_idx < seq_len                # (1, S_pad)
    else:
        key_mask = None

    # Per-head attention.  The d-wide QK^T / PV matmuls are inherent to the
    # head dimension; n_heads is small and static, so unroll in Python.
    for h in range(n_heads):
        sl = slice(h * d, (h + 1) * d)
        qh = q[:, sl].astype(jnp.bfloat16)          # (S_pad, d)
        kh = k[:, sl].astype(jnp.bfloat16)          # (S_pad, d)
        vh = v[:, sl].astype(jnp.bfloat16)          # (S_pad, d)

        # scores = (q / sqrt(d)) @ k.T  (scale already folded into Wq/bq)
        s = jax.lax.dot_general(qh, kh, (((1,), (1,)), ((), ())),
                                preferred_element_type=jnp.float32)  # (S_pad, S_pad)
        if key_mask is not None:
            s = jnp.where(key_mask, s, -jnp.inf)

        # Numerically stable softmax in f32; reciprocal goes to the EUP slot.
        m = jnp.max(s, axis=-1, keepdims=True)
        p = jnp.exp(s - m)
        denom = jnp.sum(p, axis=-1, keepdims=True)
        probs = p * pl.reciprocal(denom, approx=approx_reciprocal)

        attn_h = jnp.dot(probs.astype(jnp.bfloat16), vh,
                         preferred_element_type=jnp.float32)          # (S_pad, d)
        attn_ref[:, sl] = attn_h.astype(jnp.bfloat16)

    # Output projection: one H-deep contraction over ALL heads at once.
    out = jax.lax.dot_general(attn_ref[...], wo_ref[...],
                              (((1,), (1,)), ((), ())),
                              preferred_element_type=jnp.float32)     # (S_pad, H)
    o_ref[0] = (out + bo_ref[...]).astype(o_ref.dtype)


def multi_head_attention(x, params, *, n_heads, approx_reciprocal=True):
    """x: (B, S, H). params: PyTorch nn.Linear layout — W (out, in), b (out,)."""
    B, S, H = x.shape
    assert H % n_heads == 0
    d = H // n_heads
    inv_sqrt_d = 1.0 / math.sqrt(d)

    bf16, f32 = jnp.bfloat16, jnp.float32

    # Pad S to a sublane multiple; padded key columns are masked in-kernel and
    # padded query rows are sliced off below.
    S_pad = ((S + 7) // 8) * 8
    x_bf = x.astype(bf16)
    if S_pad != S:
        x_bf = jnp.pad(x_bf, ((0, 0), (0, S_pad - S), (0, 0)))

    # Fold 1/sqrt(d) into the Q projection (free) and cast weights to bf16.
    wq = (params["wq"] * inv_sqrt_d).astype(bf16)
    bq = (params["bq"] * inv_sqrt_d).reshape(1, H).astype(f32)
    wk = params["wk"].astype(bf16)
    bk = params["bk"].reshape(1, H).astype(f32)
    wv = params["wv"].astype(bf16)
    bv = params["bv"].reshape(1, H).astype(f32)
    wo = params["wo"].astype(bf16)
    bo = params["bo"].reshape(1, H).astype(f32)

    kernel = functools.partial(mha_kernel, n_heads=n_heads, seq_len=S,
                               approx_reciprocal=approx_reciprocal)

    x_spec = pl.BlockSpec((1, S_pad, H), lambda b: (b, 0, 0))
    # Constant block index -> weights/biases are fetched once and stay resident.
    weight_spec = pl.BlockSpec((H, H), lambda b: (0, 0))
    bias_spec = pl.BlockSpec((1, H), lambda b: (0, 0))

    out = pl.pallas_call(
        kernel,
        out_shape=jax.ShapeDtypeStruct((B, S_pad, H), x.dtype),
        grid_spec=pltpu.PrefetchScalarGridSpec(
            num_scalar_prefetch=0,
            grid=(B,),
            in_specs=[
                x_spec,                       # x (Q rows and K/V source, passed once)
                weight_spec, bias_spec,       # Q
                weight_spec, bias_spec,       # K
                weight_spec, bias_spec,       # V
                weight_spec, bias_spec,       # output projection (mlp)
            ],
            out_specs=x_spec,
            scratch_shapes=[pltpu.VMEM((S_pad, H), jnp.bfloat16)],
        ),
        compiler_params=pltpu.CompilerParams(
            dimension_semantics=("parallel",),
            vmem_limit_bytes=48 * 1024 * 1024),
    )(x_bf, wq, bq, wk, bk, wv, bv, wo, bo)

    return out[:, :S, :] if S_pad != S else out


def reference_mha(x, params, *, n_heads):
    """Pure-JAX f32 reference mirroring the PyTorch forward exactly."""
    B, S, H = x.shape
    v_dim = H // n_heads

    def linear(x, w, b):
        return x @ w.T + b

    q = linear(x, params["wq"], params["bq"]).reshape(B, S, n_heads, v_dim)
    k = linear(x, params["wk"], params["bk"]).reshape(B, S, n_heads, v_dim)
    v = linear(x, params["wv"], params["bv"]).reshape(B, S, n_heads, v_dim)
    q = jnp.transpose(q, (0, 2, 1, 3))
    k = jnp.transpose(k, (0, 2, 1, 3))
    v = jnp.transpose(v, (0, 2, 1, 3))
    scores = jax.nn.softmax(
        jnp.einsum("bhqd,bhkd->bhqk", q, k) / math.sqrt(v_dim), axis=-1)
    attn = jnp.einsum("bhqk,bhkd->bhqd", scores, v)
    attn = jnp.transpose(attn, (0, 2, 1, 3)).reshape(B, S, H)
    return linear(attn, params["wo"], params["bo"])


if __name__ == "__main__":
    B, S, H, n_heads = 2, 8, 32, 4

    key = jax.random.PRNGKey(0)
    keys = jax.random.split(key, 9)

    # Deterministic synthetic parameters (PyTorch nn.Linear layout: (out, in)).
    bound = 1.0 / math.sqrt(H)
    params = {
        "wq": jax.random.uniform(keys[0], (H, H), jnp.float32, -bound, bound),
        "bq": jax.random.uniform(keys[1], (H,), jnp.float32, -bound, bound),
        "wk": jax.random.uniform(keys[2], (H, H), jnp.float32, -bound, bound),
        "bk": jax.random.uniform(keys[3], (H,), jnp.float32, -bound, bound),
        "wv": jax.random.uniform(keys[4], (H, H), jnp.float32, -bound, bound),
        "bv": jax.random.uniform(keys[5], (H,), jnp.float32, -bound, bound),
        "wo": jax.random.uniform(keys[6], (H, H), jnp.float32, -bound, bound),
        "bo": jax.random.uniform(keys[7], (H,), jnp.float32, -bound, bound),
    }
    x = jax.random.normal(keys[8], (B, S, H), jnp.float32)

    out = multi_head_attention(x, params, n_heads=n_heads)
    out = jax.block_until_ready(out)

    ref = reference_mha(x, params, n_heads=n_heads)
    assert out.shape == (B, S, H)
    # bf16 MXU operands (f32 accumulation) + approximate reciprocal in the
    # softmax denominator -> compare with a bf16-level tolerance.
    assert jnp.allclose(out, ref, atol=2e-2, rtol=2e-2), (
        float(jnp.max(jnp.abs(out - ref))))

    print("KERNEL_OK")
</pallas_src>

<mosaic_0001>
module attributes {stable_mosaic.version = 11 : i64} {
  func.func @mha_kernel(%arg0: i32, %arg1: memref<1x8x32xbf16, #tpu.memory_space<vmem>>, %arg2: memref<32x32xbf16, #tpu.memory_space<vmem>>, %arg3: memref<1x32xf32, #tpu.memory_space<vmem>>, %arg4: memref<32x32xbf16, #tpu.memory_space<vmem>>, %arg5: memref<1x32xf32, #tpu.memory_space<vmem>>, %arg6: memref<32x32xbf16, #tpu.memory_space<vmem>>, %arg7: memref<1x32xf32, #tpu.memory_space<vmem>>, %arg8: memref<32x32xbf16, #tpu.memory_space<vmem>>, %arg9: memref<1x32xf32, #tpu.memory_space<vmem>>, %arg10: memref<1x8x32xf32, #tpu.memory_space<vmem>>, %arg11: memref<8x32xbf16, #tpu.memory_space<vmem>>) attributes {dimension_semantics = [#tpu.dimension_semantics<parallel>], iteration_bounds = array<i64: 2>, scalar_prefetch = 0 : i64, scratch_operands = 1 : i64, tpu.core_type = #tpu.core_type<tc>, window_params = [{transform_indices = @transform_0, window_bounds = array<i64: 1, 8, 32>}, {pipeline_mode = #tpu.pipeline_mode<synchronous>, transform_indices = @transform_1, window_bounds = array<i64: 32, 32>}, {pipeline_mode = #tpu.pipeline_mode<synchronous>, transform_indices = @transform_2, window_bounds = array<i64: 1, 32>}, {pipeline_mode = #tpu.pipeline_mode<synchronous>, transform_indices = @transform_3, window_bounds = array<i64: 32, 32>}, {pipeline_mode = #tpu.pipeline_mode<synchronous>, transform_indices = @transform_4, window_bounds = array<i64: 1, 32>}, {pipeline_mode = #tpu.pipeline_mode<synchronous>, transform_indices = @transform_5, window_bounds = array<i64: 32, 32>}, {pipeline_mode = #tpu.pipeline_mode<synchronous>, transform_indices = @transform_6, window_bounds = array<i64: 1, 32>}, {pipeline_mode = #tpu.pipeline_mode<synchronous>, transform_indices = @transform_7, window_bounds = array<i64: 32, 32>}, {pipeline_mode = #tpu.pipeline_mode<synchronous>, transform_indices = @transform_8, window_bounds = array<i64: 1, 32>}, {transform_indices = @transform_9, window_bounds = array<i64: 1, 8, 32>}]} {
    %c0 = arith.constant 0 : index
    %c0_0 = arith.constant 0 : index
    %c0_1 = arith.constant 0 : index
    %0 = vector.load %arg1[%c0, %c0_0, %c0_1] : memref<1x8x32xbf16, #tpu.memory_space<vmem>>, vector<1x8x32xbf16>
    %1 = vector.shape_cast %0 : vector<1x8x32xbf16> to vector<8x32xbf16>
    %c0_2 = arith.constant 0 : index
    %c0_3 = arith.constant 0 : index
    %2 = vector.load %arg2[%c0_2, %c0_3] : memref<32x32xbf16, #tpu.memory_space<vmem>>, vector<32x32xbf16>
    %cst = arith.constant dense<0.000000e+00> : vector<8x32xf32>
    %3 = tpu.matmul %1, %2, %cst {dimension_numbers = #tpu.dot_dimension_numbers<[1], [1], [0], [0], [0, 0, 1, 0], [], []>} : vector<8x32xbf16>, vector<32x32xbf16>, vector<8x32xf32> -> vector<8x32xf32>
    %c0_4 = arith.constant 0 : index
    %c0_5 = arith.constant 0 : index
    %4 = vector.load %arg3[%c0_4, %c0_5] : memref<1x32xf32, #tpu.memory_space<vmem>>, vector<1x32xf32>
    %5 = vector.broadcast %4 : vector<1x32xf32> to vector<8x32xf32>
    %6 = arith.addf %3, %5 : vector<8x32xf32>
    %c0_6 = arith.constant 0 : index
    %c0_7 = arith.constant 0 : index
    %7 = vector.load %arg4[%c0_6, %c0_7] : memref<32x32xbf16, #tpu.memory_space<vmem>>, vector<32x32xbf16>
    %cst_8 = arith.constant dense<0.000000e+00> : vector<8x32xf32>
    %8 = tpu.matmul %1, %7, %cst_8 {dimension_numbers = #tpu.dot_dimension_numbers<[1], [1], [0], [0], [0, 0, 1, 0], [], []>} : vector<8x32xbf16>, vector<32x32xbf16>, vector<8x32xf32> -> vector<8x32xf32>
    %c0_9 = arith.constant 0 : index
    %c0_10 = arith.constant 0 : index
    %9 = vector.load %arg5[%c0_9, %c0_10] : memref<1x32xf32, #tpu.memory_space<vmem>>, vector<1x32xf32>
    %10 = vector.broadcast %9 : vector<1x32xf32> to vector<8x32xf32>
    %11 = arith.addf %8, %10 : vector<8x32xf32>
    %c0_11 = arith.constant 0 : index
    %c0_12 = arith.constant 0 : index
    %12 = vector.load %arg6[%c0_11, %c0_12] : memref<32x32xbf16, #tpu.memory_space<vmem>>, vector<32x32xbf16>
    %cst_13 = arith.constant dense<0.000000e+00> : vector<8x32xf32>
    %13 = tpu.matmul %1, %12, %cst_13 {dimension_numbers = #tpu.dot_dimension_numbers<[1], [1], [0], [0], [0, 0, 1, 0], [], []>} : vector<8x32xbf16>, vector<32x32xbf16>, vector<8x32xf32> -> vector<8x32xf32>
    %c0_14 = arith.constant 0 : index
    %c0_15 = arith.constant 0 : index
    %14 = vector.load %arg7[%c0_14, %c0_15] : memref<1x32xf32, #tpu.memory_space<vmem>>, vector<1x32xf32>
    %15 = vector.broadcast %14 : vector<1x32xf32> to vector<8x32xf32>
    %16 = arith.addf %13, %15 : vector<8x32xf32>
    %17 = vector.extract_strided_slice %6 {offsets = [0, 0], sizes = [8, 8], strides = [1, 1]} : vector<8x32xf32> to vector<8x8xf32>
    %18 = arith.truncf %17 : vector<8x8xf32> to vector<8x8xbf16>
    %19 = vector.extract_strided_slice %11 {offsets = [0, 0], sizes = [8, 8], strides = [1, 1]} : vector<8x32xf32> to vector<8x8xf32>
    %20 = arith.truncf %19 : vector<8x8xf32> to vector<8x8xbf16>
    %21 = vector.extract_strided_slice %16 {offsets = [0, 0], sizes = [8, 8], strides = [1, 1]} : vector<8x32xf32> to vector<8x8xf32>
    %22 = arith.truncf %21 : vector<8x8xf32> to vector<8x8xbf16>
    %cst_16 = arith.constant dense<0.000000e+00> : vector<8x8xf32>
    %23 = tpu.matmul %18, %20, %cst_16 {dimension_numbers = #tpu.dot_dimension_numbers<[1], [1], [0], [0], [0, 0, 1, 0], [], []>} : vector<8x8xbf16>, vector<8x8xbf16>, vector<8x8xf32> -> vector<8x8xf32>
    %cst_17 = arith.constant dense<0xFF800000> : vector<8xf32>
    %24 = vector.multi_reduction <maximumf>, %23, %cst_17 [1] : vector<8x8xf32> to vector<8xf32>
    %25 = vector.shape_cast %24 : vector<8xf32> to vector<8x1xf32>
    %26 = vector.broadcast %25 : vector<8x1xf32> to vector<8x8xf32>
    %27 = arith.subf %23, %26 : vector<8x8xf32>
    %28 = math.exp %27 : vector<8x8xf32>
    %cst_18 = arith.constant dense<0.000000e+00> : vector<8xf32>
    %29 = vector.multi_reduction <add>, %28, %cst_18 [1] : vector<8x8xf32> to vector<8xf32>
    %30 = vector.shape_cast %29 : vector<8xf32> to vector<8x1xf32>
    %31 = tpu.reciprocal %30 {approx = true} : vector<8x1xf32> -> vector<8x1xf32>
    %32 = vector.broadcast %31 : vector<8x1xf32> to vector<8x8xf32>
    %33 = arith.mulf %28, %32 : vector<8x8xf32>
    %34 = arith.truncf %33 : vector<8x8xf32> to vector<8x8xbf16>
    %cst_19 = arith.constant dense<0.000000e+00> : vector<8x8xf32>
    %35 = tpu.matmul %34, %22, %cst_19 {dimension_numbers = #tpu.dot_dimension_numbers<[1], [0], [0], [1], [0, 0, 1, 1], [], []>} : vector<8x8xbf16>, vector<8x8xbf16>, vector<8x8xf32> -> vector<8x8xf32>
    %36 = arith.truncf %35 : vector<8x8xf32> to vector<8x8xbf16>
    %c0_20 = arith.constant 0 : index
    %c0_21 = arith.constant 0 : index
    %37 = vector.load %arg11[%c0_20, %c0_21] : memref<8x32xbf16, #tpu.memory_space<vmem>>, vector<8x8xbf16>
    tpu.vector_store %arg11[%c0_20, %c0_21], %36 {strides = array<i32>} : memref<8x32xbf16, #tpu.memory_space<vmem>>, vector<8x8xbf16>,
    %38 = vector.extract_strided_slice %6 {offsets = [0, 8], sizes = [8, 8], strides = [1, 1]} : vector<8x32xf32> to vector<8x8xf32>
    %39 = arith.truncf %38 : vector<8x8xf32> to vector<8x8xbf16>
    %40 = vector.extract_strided_slice %11 {offsets = [0, 8], sizes = [8, 8], strides = [1, 1]} : vector<8x32xf32> to vector<8x8xf32>
    %41 = arith.truncf %40 : vector<8x8xf32> to vector<8x8xbf16>
    %42 = vector.extract_strided_slice %16 {offsets = [0, 8], sizes = [8, 8], strides = [1, 1]} : vector<8x32xf32> to vector<8x8xf32>
    %43 = arith.truncf %42 : vector<8x8xf32> to vector<8x8xbf16>
    %cst_22 = arith.constant dense<0.000000e+00> : vector<8x8xf32>
    %44 = tpu.matmul %39, %41, %cst_22 {dimension_numbers = #tpu.dot_dimension_numbers<[1], [1], [0], [0], [0, 0, 1, 0], [], []>} : vector<8x8xbf16>, vector<8x8xbf16>, vector<8x8xf32> -> vector<8x8xf32>
    %cst_23 = arith.constant dense<0xFF800000> : vector<8xf32>
    %45 = vector.multi_reduction <maximumf>, %44, %cst_23 [1] : vector<8x8xf32> to vector<8xf32>
    %46 = vector.shape_cast %45 : vector<8xf32> to vector<8x1xf32>
    %47 = vector.broadcast %46 : vector<8x1xf32> to vector<8x8xf32>
    %48 = arith.subf %44, %47 : vector<8x8xf32>
    %49 = math.exp %48 : vector<8x8xf32>
    %cst_24 = arith.constant dense<0.000000e+00> : vector<8xf32>
    %50 = vector.multi_reduction <add>, %49, %cst_24 [1] : vector<8x8xf32> to vector<8xf32>
    %51 = vector.shape_cast %50 : vector<8xf32> to vector<8x1xf32>
    %52 = tpu.reciprocal %51 {approx = true} : vector<8x1xf32> -> vector<8x1xf32>
    %53 = vector.broadcast %52 : vector<8x1xf32> to vector<8x8xf32>
    %54 = arith.mulf %49, %53 : vector<8x8xf32>
    %55 = arith.truncf %54 : vector<8x8xf32> to vector<8x8xbf16>
    %cst_25 = arith.constant dense<0.000000e+00> : vector<8x8xf32>
    %56 = tpu.matmul %55, %43, %cst_25 {dimension_numbers = #tpu.dot_dimension_numbers<[1], [0], [0], [1], [0, 0, 1, 1], [], []>} : vector<8x8xbf16>, vector<8x8xbf16>, vector<8x8xf32> -> vector<8x8xf32>
    %57 = arith.truncf %56 : vector<8x8xf32> to vector<8x8xbf16>
    %c0_26 = arith.constant 0 : index
    %c8 = arith.constant 8 : index
    %58 = vector.load %arg11[%c0_26, %c8] : memref<8x32xbf16, #tpu.memory_space<vmem>>, vector<8x8xbf16>
    tpu.vector_store %arg11[%c0_26, %c8], %57 {strides = array<i32>} : memref<8x32xbf16, #tpu.memory_space<vmem>>, vector<8x8xbf16>,
    %59 = vector.extract_strided_slice %6 {offsets = [0, 16], sizes = [8, 8], strides = [1, 1]} : vector<8x32xf32> to vector<8x8xf32>
    %60 = arith.truncf %59 : vector<8x8xf32> to vector<8x8xbf16>
    %61 = vector.extract_strided_slice %11 {offsets = [0, 16], sizes = [8, 8], strides = [1, 1]} : vector<8x32xf32> to vector<8x8xf32>
    %62 = arith.truncf %61 : vector<8x8xf32> to vector<8x8xbf16>
    %63 = vector.extract_strided_slice %16 {offsets = [0, 16], sizes = [8, 8], strides = [1, 1]} : vector<8x32xf32> to vector<8x8xf32>
    %64 = arith.truncf %63 : vector<8x8xf32> to vector<8x8xbf16>
    %cst_27 = arith.constant dense<0.000000e+00> : vector<8x8xf32>
    %65 = tpu.matmul %60, %62, %cst_27 {dimension_numbers = #tpu.dot_dimension_numbers<[1], [1], [0], [0], [0, 0, 1, 0], [], []>} : vector<8x8xbf16>, vector<8x8xbf16>, vector<8x8xf32> -> vector<8x8xf32>
    %cst_28 = arith.constant dense<0xFF800000> : vector<8xf32>
    %66 = vector.multi_reduction <maximumf>, %65, %cst_28 [1] : vector<8x8xf32> to vector<8xf32>
    %67 = vector.shape_cast %66 : vector<8xf32> to vector<8x1xf32>
    %68 = vector.broadcast %67 : vector<8x1xf32> to vector<8x8xf32>
    %69 = arith.subf %65, %68 : vector<8x8xf32>
    %70 = math.exp %69 : vector<8x8xf32>
    %cst_29 = arith.constant dense<0.000000e+00> : vector<8xf32>
    %71 = vector.multi_reduction <add>, %70, %cst_29 [1] : vector<8x8xf32> to vector<8xf32>
    %72 = vector.shape_cast %71 : vector<8xf32> to vector<8x1xf32>
    %73 = tpu.reciprocal %72 {approx = true} : vector<8x1xf32> -> vector<8x1xf32>
    %74 = vector.broadcast %73 : vector<8x1xf32> to vector<8x8xf32>
    %75 = arith.mulf %70, %74 : vector<8x8xf32>
    %76 = arith.truncf %75 : vector<8x8xf32> to vector<8x8xbf16>
    %cst_30 = arith.constant dense<0.000000e+00> : vector<8x8xf32>
    %77 = tpu.matmul %76, %64, %cst_30 {dimension_numbers = #tpu.dot_dimension_numbers<[1], [0], [0], [1], [0, 0, 1, 1], [], []>} : vector<8x8xbf16>, vector<8x8xbf16>, vector<8x8xf32> -> vector<8x8xf32>
    %78 = arith.truncf %77 : vector<8x8xf32> to vector<8x8xbf16>
    %c0_31 = arith.constant 0 : index
    %c16 = arith.constant 16 : index
    %79 = vector.load %arg11[%c0_31, %c16] : memref<8x32xbf16, #tpu.memory_space<vmem>>, vector<8x8xbf16>
    tpu.vector_store %arg11[%c0_31, %c16], %78 {strides = array<i32>} : memref<8x32xbf16, #tpu.memory_space<vmem>>, vector<8x8xbf16>,
    %80 = vector.extract_strided_slice %6 {offsets = [0, 24], sizes = [8, 8], strides = [1, 1]} : vector<8x32xf32> to vector<8x8xf32>
    %81 = arith.truncf %80 : vector<8x8xf32> to vector<8x8xbf16>
    %82 = vector.extract_strided_slice %11 {offsets = [0, 24], sizes = [8, 8], strides = [1, 1]} : vector<8x32xf32> to vector<8x8xf32>
    %83 = arith.truncf %82 : vector<8x8xf32> to vector<8x8xbf16>
    %84 = vector.extract_strided_slice %16 {offsets = [0, 24], sizes = [8, 8], strides = [1, 1]} : vector<8x32xf32> to vector<8x8xf32>
    %85 = arith.truncf %84 : vector<8x8xf32> to vector<8x8xbf16>
    %cst_32 = arith.constant dense<0.000000e+00> : vector<8x8xf32>
    %86 = tpu.matmul %81, %83, %cst_32 {dimension_numbers = #tpu.dot_dimension_numbers<[1], [1], [0], [0], [0, 0, 1, 0], [], []>} : vector<8x8xbf16>, vector<8x8xbf16>, vector<8x8xf32> -> vector<8x8xf32>
    %cst_33 = arith.constant dense<0xFF800000> : vector<8xf32>
    %87 = vector.multi_reduction <maximumf>, %86, %cst_33 [1] : vector<8x8xf32> to vector<8xf32>
    %88 = vector.shape_cast %87 : vector<8xf32> to vector<8x1xf32>
    %89 = vector.broadcast %88 : vector<8x1xf32> to vector<8x8xf32>
    %90 = arith.subf %86, %89 : vector<8x8xf32>
    %91 = math.exp %90 : vector<8x8xf32>
    %cst_34 = arith.constant dense<0.000000e+00> : vector<8xf32>
    %92 = vector.multi_reduction <add>, %91, %cst_34 [1] : vector<8x8xf32> to vector<8xf32>
    %93 = vector.shape_cast %92 : vector<8xf32> to vector<8x1xf32>
    %94 = tpu.reciprocal %93 {approx = true} : vector<8x1xf32> -> vector<8x1xf32>
    %95 = vector.broadcast %94 : vector<8x1xf32> to vector<8x8xf32>
    %96 = arith.mulf %91, %95 : vector<8x8xf32>
    %97 = arith.truncf %96 : vector<8x8xf32> to vector<8x8xbf16>
    %cst_35 = arith.constant dense<0.000000e+00> : vector<8x8xf32>
    %98 = tpu.matmul %97, %85, %cst_35 {dimension_numbers = #tpu.dot_dimension_numbers<[1], [0], [0], [1], [0, 0, 1, 1], [], []>} : vector<8x8xbf16>, vector<8x8xbf16>, vector<8x8xf32> -> vector<8x8xf32>
    %99 = arith.truncf %98 : vector<8x8xf32> to vector<8x8xbf16>
    %c0_36 = arith.constant 0 : index
    %c24 = arith.constant 24 : index
    %100 = vector.load %arg11[%c0_36, %c24] : memref<8x32xbf16, #tpu.memory_space<vmem>>, vector<8x8xbf16>
    tpu.vector_store %arg11[%c0_36, %c24], %99 {strides = array<i32>} : memref<8x32xbf16, #tpu.memory_space<vmem>>, vector<8x8xbf16>,
    %c0_37 = arith.constant 0 : index
    %c0_38 = arith.constant 0 : index
    %101 = vector.load %arg11[%c0_37, %c0_38] : memref<8x32xbf16, #tpu.memory_space<vmem>>, vector<8x32xbf16>
    %c0_39 = arith.constant 0 : index
    %c0_40 = arith.constant 0 : index
    %102 = vector.load %arg8[%c0_39, %c0_40] : memref<32x32xbf16, #tpu.memory_space<vmem>>, vector<32x32xbf16>
    %cst_41 = arith.constant dense<0.000000e+00> : vector<8x32xf32>
    %103 = tpu.matmul %101, %102, %cst_41 {dimension_numbers = #tpu.dot_dimension_numbers<[1], [1], [0], [0], [0, 0, 1, 0], [], []>} : vector<8x32xbf16>, vector<32x32xbf16>, vector<8x32xf32> -> vector<8x32xf32>
    %c0_42 = arith.constant 0 : index
    %c0_43 = arith.constant 0 : index
    %104 = vector.load %arg9[%c0_42, %c0_43] : memref<1x32xf32, #tpu.memory_space<vmem>>, vector<1x32xf32>
    %105 = vector.broadcast %104 : vector<1x32xf32> to vector<8x32xf32>
    %106 = arith.addf %103, %105 : vector<8x32xf32>
    %c0_44 = arith.constant 0 : index
    %c0_45 = arith.constant 0 : index
    %c0_46 = arith.constant 0 : index
    %107 = vector.load %arg10[%c0_44, %c0_45, %c0_46] : memref<1x8x32xf32, #tpu.memory_space<vmem>>, vector<1x8x32xf32>
    %108 = vector.shape_cast %107 : vector<1x8x32xf32> to vector<8x32xf32>
    %109 = vector.shape_cast %106 : vector<8x32xf32> to vector<1x8x32xf32>
    tpu.vector_store %arg10[%c0_44, %c0_45, %c0_46], %109 {strides = array<i32>} : memref<1x8x32xf32, #tpu.memory_space<vmem>>, vector<1x8x32xf32>,
    return
  }
  func.func @transform_0(%arg0: i32) -> (i32, i32, i32) {
    %c0_i32 = arith.constant 0 : i32
    %c0_i32_0 = arith.constant 0 : i32
    %c0_i32_1 = arith.constant 0 : i32
    return %arg0, %c0_i32, %c0_i32_0 : i32, i32, i32
  }
  func.func @transform_1(%arg0: i32) -> (i32, i32) {
    %c0_i32 = arith.constant 0 : i32
    %c0_i32_0 = arith.constant 0 : i32
    %c0_i32_1 = arith.constant 0 : i32
    return %c0_i32, %c0_i32_0 : i32, i32
  }
  func.func @transform_2(%arg0: i32) -> (i32, i32) {
    %c0_i32 = arith.constant 0 : i32
    %c0_i32_0 = arith.constant 0 : i32
    %c0_i32_1 = arith.constant 0 : i32
    return %c0_i32, %c0_i32_0 : i32, i32
  }
  func.func @transform_3(%arg0: i32) -> (i32, i32) {
    %c0_i32 = arith.constant 0 : i32
    %c0_i32_0 = arith.constant 0 : i32
    %c0_i32_1 = arith.constant 0 : i32
    return %c0_i32, %c0_i32_0 : i32, i32
  }
  func.func @transform_4(%arg0: i32) -> (i32, i32) {
    %c0_i32 = arith.constant 0 : i32
    %c0_i32_0 = arith.constant 0 : i32
    %c0_i32_1 = arith.constant 0 : i32
    return %c0_i32, %c0_i32_0 : i32, i32
  }
  func.func @transform_5(%arg0: i32) -> (i32, i32) {
    %c0_i32 = arith.constant 0 : i32
    %c0_i32_0 = arith.constant 0 : i32
    %c0_i32_1 = arith.constant 0 : i32
    return %c0_i32, %c0_i32_0 : i32, i32
  }
  func.func @transform_6(%arg0: i32) -> (i32, i32) {
    %c0_i32 = arith.constant 0 : i32
    %c0_i32_0 = arith.constant 0 : i32
    %c0_i32_1 = arith.constant 0 : i32
    return %c0_i32, %c0_i32_0 : i32, i32
  }
  func.func @transform_7(%arg0: i32) -> (i32, i32) {
    %c0_i32 = arith.constant 0 : i32
    %c0_i32_0 = arith.constant 0 : i32
    %c0_i32_1 = arith.constant 0 : i32
    return %c0_i32, %c0_i32_0 : i32, i32
  }
  func.func @transform_8(%arg0: i32) -> (i32, i32) {
    %c0_i32 = arith.constant 0 : i32
    %c0_i32_0 = arith.constant 0 : i32
    %c0_i32_1 = arith.constant 0 : i32
    return %c0_i32, %c0_i32_0 : i32, i32
  }
  func.func @transform_9(%arg0: i32) -> (i32, i32, i32) {
    %c0_i32 = arith.constant 0 : i32
    %c0_i32_0 = arith.constant 0 : i32
    %c0_i32_1 = arith.constant 0 : i32
    return %arg0, %c0_i32, %c0_i32_0 : i32, i32, i32
  }
}

</mosaic_0001>

<llo_original>
// kernel: tpu_custom_call.1
$region0: #{tpu_custom_call.1}
  #allocation0 [shape = 'u32[]', space=smem, size = 0x4, offset = 0x4, fixed_abs, tag = 'smem constant byte address 0x4 - core index']
  #allocation1 [shape = 'u32[144,128]{1,0:T(1,128)}', space=vmem, size = 0x12000, scoped, tag = 'internal scratch']
  #allocation2 [shape = 'bf16[8,32]{1,0:T(8,128)(2,1)}', space=vmem, size = 0x800, scoped, tag = 'scratch operand']
  %s0 = inlined_call_operand.hbm [shape: bf16[2,8,32], index: 0, kind: input, shape index: {}]
  %s1 = inlined_call_operand.hbm [shape: bf16[32,32], index: 1, kind: input, shape index: {}]
  %s2 = inlined_call_operand.vmem [shape: f32[1,32], index: 2, kind: input, shape index: {}]
  %s3 = inlined_call_operand.hbm [shape: bf16[32,32], index: 3, kind: input, shape index: {}]
  %s4 = inlined_call_operand.vmem [shape: f32[1,32], index: 4, kind: input, shape index: {}]
  %s5 = inlined_call_operand.vmem [shape: bf16[32,32], index: 5, kind: input, shape index: {}]
  %s6 = inlined_call_operand.vmem [shape: f32[1,32], index: 6, kind: input, shape index: {}]
  %s7 = inlined_call_operand.hbm [shape: bf16[32,32], index: 7, kind: input, shape index: {}]
  %s8 = inlined_call_operand.vmem [shape: f32[1,32], index: 8, kind: input, shape index: {}]
  %s9 = inlined_call_operand.hbm [shape: f32[2,8,32], index: 9, kind: output, shape index: {}]
  %s10 = sld [smem:[#allocation0]]
  $region85: #{tpu_custom_call.1} parent=0
    _
  %s12 = ssub.s32 1, %s10
  %s13 = scalar_select 0, %s12, %s10
  $region1: #{tpu_custom_call.1} parent=0
    #allocation3 [shape = 'u8[4096]{0}', space=vmem, size = 0x1000, scoped, tag = 'input window, operand 0']
    #allocation4 [shape = 's32[2]{0}', space=sflag, size = 0x8, scoped, tag = 'scoped memory for tpu_custom_call.1']
    #allocation5 [shape = 's32[2]{0}', space=sflag, size = 0x8, scoped, tag = 'scoped memory for tpu_custom_call.1']
    #allocation6 [shape = 'u8[8192]{0}', space=vmem, size = 0x2000, scoped, tag = 'input window, operand 1, single buffered']
    #allocation7 [shape = 's32[1]{0}', space=sflag, size = 0x4, scoped, tag = 'scoped memory for tpu_custom_call.1']
    #allocation8 [shape = 'u8[8192]{0}', space=vmem, size = 0x2000, scoped, tag = 'input window, operand 3, single buffered']
    #allocation9 [shape = 'u8[8192]{0}', space=vmem, size = 0x2000, scoped, tag = 'input window, operand 7, single buffered']
    #allocation10 [shape = 's32[1]{0}', space=sflag, size = 0x4, scoped, tag = 'scoped memory for tpu_custom_call.1']
    #allocation11 [shape = 'u8[8192]{0}', space=vmem, size = 0x2000, scoped, tag = 'output window, operand 0']
    %14 = vsyncpa [#allocation4], 0
    %s15 = scalar_lea.sflag [#allocation4], 1
    %16 = vsyncpa %s15, 0
    %17 = vsyncpa [#allocation7], 0
    %18 = vsyncpa [#allocation10], 0
    %19 = vsyncpa [#allocation5], 0
    %s20 = scalar_lea.sflag [#allocation5], 1
    %21 = vsyncpa %s20, 0
    loop: start=0, step=1, limit=4
    $region2: #{tpu_custom_call.1} parent=1 // loop_pre_header
      _
    $region3: #{tpu_custom_call.1} parent=1 // loop_header
      %s23 = sphi 0, %s27
      %p24 = scmp.ge.s32.totalorder %s23, 4
      %s33 = sphi 0, %s35
      %s36 = sphi 0, %s33
      %s37 = sphi 0, %s36
      %s53 = sphi 0, %s37
      %s57 = sphi 0, %s57
      %s59 = sphi 0, %s57
      %s60 = sphi 0, %s59
      %s74 = sphi 0, %s60
      %s78 = sphi 0, %s78
      %s80 = sphi 0, %s78
      %s81 = sphi 0, %s80
      %s95 = sphi 0, %s81
      %s99 = sphi 0, %s99
      %s101 = sphi 0, %s99
      %s102 = sphi 0, %s101
      %s116 = sphi 0, %s102
      %s120 = sphi 0, %s120
      %s122 = sphi 0, %s120
      %s123 = sphi 0, %s122
      %s137 = sphi 0, %s123
      %s141 = sphi 0, %s141
      %s143 = sphi 0, %s141
      %s144 = sphi 0, %s143
      %s158 = sphi 0, %s144
      %s162 = sphi 0, %s162
      %s164 = sphi 0, %s162
      %s165 = sphi 0, %s164
      %s179 = sphi 0, %s165
      %s183 = sphi 0, %s183
      %s185 = sphi 0, %s183
      %s186 = sphi 0, %s185
      %s200 = sphi 0, %s186
      %s204 = sphi 0, %s204
      %s206 = sphi 0, %s204
      %s207 = sphi 0, %s206
      %s221 = sphi 0, %s207
      %s227 = sphi 0, %s229
      %s230 = sphi 0, %s227
      %s231 = sphi 0, %s230
      %s247 = sphi 0, %s231
    $region4: #{tpu_custom_call.1} parent=1 // loop_header_branch
      %26 = sbr.rel (%p24) target = $region8
    $region5: #{tpu_custom_call.1} parent=1 // loop_body
      %s28 = ssub.s32 %s23, 1
      %s29 = ssub.s32 %s23, 2
      %s30 = sadd.s32 %s23, 1
      %s31 = ssub.s32 %s23, %s30
      %p32 = scmp.eq.s32.totalorder %s31, 0
      %s34 = sadd.s32 %s33, 1
      %s35 = scalar_select %p32, %s33, %s34
      %p38 = pneg %p32
      %p39 = scmp.eq.s32.totalorder %s23, 1
      %p40 = por %p38, %p39
      %p41 = scmp.ne.s32.totalorder %s33, %s36
      %p42 = scmp.eq.s32.totalorder %s23, 0
      %p43 = por %p41, %p42
      %p44 = scmp.ne.s32.totalorder %s33, %s36
      %p45 = scmp.eq.s32.totalorder %s28, 1
      %p46 = por %p44, %p45
      %p47 = scmp.ne.s32.totalorder %s36, %s37
      %p48 = scmp.eq.s32.totalorder %s28, 0
      %p49 = por %p47, %p48
      %p50 = scmp.ne.s32.totalorder %s36, %s37
      %p51 = scmp.eq.s32.totalorder %s29, 1
      %p52 = por %p50, %p51
      %p54 = scmp.ne.s32.totalorder %s37, %s53
      %p55 = scmp.eq.s32.totalorder %s29, 0
      %p56 = por %p54, %p55
      %s58 = sadd.s32 %s57, 1
      %p61 = scmp.eq.s32.totalorder %s23, 1
      %p62 = scmp.ne.s32.totalorder %s57, %s59
      %p63 = scmp.eq.s32.totalorder %s23, 0
      %p64 = por %p62, %p63
      %p65 = scmp.ne.s32.totalorder %s57, %s59
      %p66 = scmp.eq.s32.totalorder %s28, 1
      %p67 = por %p65, %p66
      %p68 = scmp.ne.s32.totalorder %s59, %s60
      %p69 = scmp.eq.s32.totalorder %s28, 0
      %p70 = por %p68, %p69
      %p71 = scmp.ne.s32.totalorder %s59, %s60
      %p72 = scmp.eq.s32.totalorder %s29, 1
      %p73 = por %p71, %p72
      %p75 = scmp.ne.s32.totalorder %s60, %s74
      %p76 = scmp.eq.s32.totalorder %s29, 0
      %p77 = por %p75, %p76
      %s79 = sadd.s32 %s78, 1
      %p82 = scmp.eq.s32.totalorder %s23, 1
      %p83 = scmp.ne.s32.totalorder %s78, %s80
      %p84 = scmp.eq.s32.totalorder %s23, 0
      %p85 = por %p83, %p84
      %p86 = scmp.ne.s32.totalorder %s78, %s80
      %p87 = scmp.eq.s32.totalorder %s28, 1
      %p88 = por %p86, %p87
      %p89 = scmp.ne.s32.totalorder %s80, %s81
      %p90 = scmp.eq.s32.totalorder %s28, 0
      %p91 = por %p89, %p90
      %p92 = scmp.ne.s32.totalorder %s80, %s81
      %p93 = scmp.eq.s32.totalorder %s29, 1
      %p94 = por %p92, %p93
      %p96 = scmp.ne.s32.totalorder %s81, %s95
      %p97 = scmp.eq.s32.totalorder %s29, 0
      %p98 = por %p96, %p97
      %s100 = sadd.s32 %s99, 1
      %p103 = scmp.eq.s32.totalorder %s23, 1
      %p104 = scmp.ne.s32.totalorder %s99, %s101
      %p105 = scmp.eq.s32.totalorder %s23, 0
      %p106 = por %p104, %p105
      %p107 = scmp.ne.s32.totalorder %s99, %s101
      %p108 = scmp.eq.s32.totalorder %s28, 1
      %p109 = por %p107, %p108
      %p110 = scmp.ne.s32.totalorder %s101, %s102
      %p111 = scmp.eq.s32.totalorder %s28, 0
      %p112 = por %p110, %p111
      %p113 = scmp.ne.s32.totalorder %s101, %s102
      %p114 = scmp.eq.s32.totalorder %s29, 1
      %p115 = por %p113, %p114
      %p117 = scmp.ne.s32.totalorder %s102, %s116
      %p118 = scmp.eq.s32.totalorder %s29, 0
      %p119 = por %p117, %p118
      %s121 = sadd.s32 %s120, 1
      %p124 = scmp.eq.s32.totalorder %s23, 1
      %p125 = scmp.ne.s32.totalorder %s120, %s122
      %p126 = scmp.eq.s32.totalorder %s23, 0
      %p127 = por %p125, %p126
      %p128 = scmp.ne.s32.totalorder %s120, %s122
      %p129 = scmp.eq.s32.totalorder %s28, 1
      %p130 = por %p128, %p129
      %p131 = scmp.ne.s32.totalorder %s122, %s123
      %p132 = scmp.eq.s32.totalorder %s28, 0
      %p133 = por %p131, %p132
      %p134 = scmp.ne.s32.totalorder %s122, %s123
      %p135 = scmp.eq.s32.totalorder %s29, 1
      %p136 = por %p134, %p135
      %p138 = scmp.ne.s32.totalorder %s123, %s137
      %p139 = scmp.eq.s32.totalorder %s29, 0
      %p140 = por %p138, %p139
      %s142 = sadd.s32 %s141, 1
      %p145 = scmp.eq.s32.totalorder %s23, 1
      %p146 = scmp.ne.s32.totalorder %s141, %s143
      %p147 = scmp.eq.s32.totalorder %s23, 0
      %p148 = por %p146, %p147
      %p149 = scmp.ne.s32.totalorder %s141, %s143
      %p150 = scmp.eq.s32.totalorder %s28, 1
      %p151 = por %p149, %p150
      %p152 = scmp.ne.s32.totalorder %s143, %s144
      %p153 = scmp.eq.s32.totalorder %s28, 0
      %p154 = por %p152, %p153
      %p155 = scmp.ne.s32.totalorder %s143, %s144
      %p156 = scmp.eq.s32.totalorder %s29, 1
      %p157 = por %p155, %p156
      %p159 = scmp.ne.s32.totalorder %s144, %s158
      %p160 = scmp.eq.s32.totalorder %s29, 0
      %p161 = por %p159, %p160
      %s163 = sadd.s32 %s162, 1
      %p166 = scmp.eq.s32.totalorder %s23, 1
      %p167 = scmp.ne.s32.totalorder %s162, %s164
      %p168 = scmp.eq.s32.totalorder %s23, 0
      %p169 = por %p167, %p168
      %p170 = scmp.ne.s32.totalorder %s162, %s164
      %p171 = scmp.eq.s32.totalorder %s28, 1
      %p172 = por %p170, %p171
      %p173 = scmp.ne.s32.totalorder %s164, %s165
      %p174 = scmp.eq.s32.totalorder %s28, 0
      %p175 = por %p173, %p174
      %p176 = scmp.ne.s32.totalorder %s164, %s165
      %p177 = scmp.eq.s32.totalorder %s29, 1
      %p178 = por %p176, %p177
      %p180 = scmp.ne.s32.totalorder %s165, %s179
      %p181 = scmp.eq.s32.totalorder %s29, 0
      %p182 = por %p180, %p181
      %s184 = sadd.s32 %s183, 1
      %p187 = scmp.eq.s32.totalorder %s23, 1
      %p188 = scmp.ne.s32.totalorder %s183, %s185
      %p189 = scmp.eq.s32.totalorder %s23, 0
      %p190 = por %p188, %p189
      %p191 = scmp.ne.s32.totalorder %s183, %s185
      %p192 = scmp.eq.s32.totalorder %s28, 1
      %p193 = por %p191, %p192
      %p194 = scmp.ne.s32.totalorder %s185, %s186
      %p195 = scmp.eq.s32.totalorder %s28, 0
      %p196 = por %p194, %p195
      %p197 = scmp.ne.s32.totalorder %s185, %s186
      %p198 = scmp.eq.s32.totalorder %s29, 1
      %p199 = por %p197, %p198
      %p201 = scmp.ne.s32.totalorder %s186, %s200
      %p202 = scmp.eq.s32.totalorder %s29, 0
      %p203 = por %p201, %p202
      %s205 = sadd.s32 %s204, 1
      %p208 = scmp.eq.s32.totalorder %s23, 1
      %p209 = scmp.ne.s32.totalorder %s204, %s206
      %p210 = scmp.eq.s32.totalorder %s23, 0
      %p211 = por %p209, %p210
      %p212 = scmp.ne.s32.totalorder %s204, %s206
      %p213 = scmp.eq.s32.totalorder %s28, 1
      %p214 = por %p212, %p213
      %p215 = scmp.ne.s32.totalorder %s206, %s207
      %p216 = scmp.eq.s32.totalorder %s28, 0
      %p217 = por %p215, %p216
      %p218 = scmp.ne.s32.totalorder %s206, %s207
      %p219 = scmp.eq.s32.totalorder %s29, 1
      %p220 = por %p218, %p219
      %p222 = scmp.ne.s32.totalorder %s207, %s221
      %p223 = scmp.eq.s32.totalorder %s29, 0
      %p224 = por %p222, %p223
      %s225 = ssub.s32 %s23, %s30
      %p226 = scmp.eq.s32.totalorder %s225, 0
      %s228 = sadd.s32 %s227, 1
      %s229 = scalar_select %p226, %s227, %s228
      %p232 = pneg %p226
      %p233 = scmp.eq.s32.totalorder %s23, 1
      %p234 = por %p232, %p233
      %p235 = scmp.ne.s32.totalorder %s227, %s230
      %p236 = scmp.eq.s32.totalorder %s23, 0
      %p237 = por %p235, %p236
      %p238 = scmp.ne.s32.totalorder %s227, %s230
      %p239 = scmp.eq.s32.totalorder %s28, 1
      %p240 = por %p238, %p239
      %p241 = scmp.ne.s32.totalorder %s230, %s231
      %p242 = scmp.eq.s32.totalorder %s28, 0
      %p243 = por %p241, %p242
      %p244 = scmp.ne.s32.totalorder %s230, %s231
      %p245 = scmp.eq.s32.totalorder %s29, 1
      %p246 = por %p244, %p245
      %p248 = scmp.ne.s32.totalorder %s231, %s247
      %p249 = scmp.eq.s32.totalorder %s29, 0
      %p250 = por %p248, %p249
      %p251 = scmp.le.s32.totalorder 1, %s23
      %p252 = scmp.lt.s32.totalorder %s23, 3
      %p253 = pnand %p251, %p252
      %p254 = pneg %p253
      // Predicated region
      $region9: #{tpu_custom_call.1} parent=5 // pred_check
        _
      $region10: #{tpu_custom_call.1} parent=5 // pred_check_branch
        %256 = sbr.rel (%p253) target = $region12
      $region11: #{tpu_custom_call.1} parent=5 // pred_region
        %s257 = ssub.s32 %s23, 1
        // Predicated region
        $region13: #{tpu_custom_call.1} parent=11 // pred_check
          %p258 = pneg %p70
        $region14: #{tpu_custom_call.1} parent=11 // pred_check_branch
          %260 = sbr.rel (%p258) target = $region16
        $region15: #{tpu_custom_call.1} parent=11 // pred_region
          %s262 = ssub.s32 256, 256
          %263 = vsyncadd [#allocation7], %s262
          %s264 = sshll.u32 [#allocation6], 4
          %s265 = int_to_ptr.vmem [resolvable:$true] %s264
          %270 = dma.hbm_to_vmem [thread:$0]  %s1, 256, %s265, [#allocation7], 64, 64, 4
        $region16: #{tpu_custom_call.1} parent=11 // pred_fallthru
          _
        // Predicated region
        $region17: #{tpu_custom_call.1} parent=11 // pred_check
          %p271 = pneg %p91
        $region18: #{tpu_custom_call.1} parent=11 // pred_check_branch
          %273 = sbr.rel (%p271) target = $region20
        $region19: #{tpu_custom_call.1} parent=11 // pred_region
          _
        $region20: #{tpu_custom_call.1} parent=11 // pred_fallthru
          _
        // Predicated region
        $region21: #{tpu_custom_call.1} parent=11 // pred_check
          %p274 = pneg %p112
        $region22: #{tpu_custom_call.1} parent=11 // pred_check_branch
          %276 = sbr.rel (%p274) target = $region24
        $region23: #{tpu_custom_call.1} parent=11 // pred_region
          %s278 = ssub.s32 256, 256
          %279 = vsyncadd [#allocation7], %s278
          %s280 = sshll.u32 [#allocation8], 4
          %s281 = int_to_ptr.vmem [resolvable:$true] %s280
          %286 = dma.hbm_to_vmem [thread:$0]  %s3, 256, %s281, [#allocation7], 64, 64, 4
        $region24: #{tpu_custom_call.1} parent=11 // pred_fallthru
          _
        // Predicated region
        $region25: #{tpu_custom_call.1} parent=11 // pred_check
          %p287 = pneg %p133
        $region26: #{tpu_custom_call.1} parent=11 // pred_check_branch
          %289 = sbr.rel (%p287) target = $region28
        $region27: #{tpu_custom_call.1} parent=11 // pred_region
          _
        $region28: #{tpu_custom_call.1} parent=11 // pred_fallthru
          _
        // Predicated region
        $region29: #{tpu_custom_call.1} parent=11 // pred_check
          %p290 = pneg %p154
        $region30: #{tpu_custom_call.1} parent=11 // pred_check_branch
          %292 = sbr.rel (%p290) target = $region32
        $region31: #{tpu_custom_call.1} parent=11 // pred_region
          _
        $region32: #{tpu_custom_call.1} parent=11 // pred_fallthru
          _
        // Predicated region
        $region33: #{tpu_custom_call.1} parent=11 // pred_check
          %p293 = pneg %p175
        $region34: #{tpu_custom_call.1} parent=11 // pred_check_branch
          %295 = sbr.rel (%p293) target = $region36
        $region35: #{tpu_custom_call.1} parent=11 // pred_region
          _
        $region36: #{tpu_custom_call.1} parent=11 // pred_fallthru
          _
        // Predicated region
        $region37: #{tpu_custom_call.1} parent=11 // pred_check
          %p296 = pneg %p196
        $region38: #{tpu_custom_call.1} parent=11 // pred_check_branch
          %298 = sbr.rel (%p296) target = $region40
        $region39: #{tpu_custom_call.1} parent=11 // pred_region
          %s300 = ssub.s32 256, 256
          %301 = vsyncadd [#allocation10], %s300
          %s302 = sshll.u32 [#allocation9], 4
          %s303 = int_to_ptr.vmem [resolvable:$true] %s302
          %308 = dma.hbm_to_vmem [thread:$0]  %s7, 256, %s303, [#allocation10], 64, 64, 4
        $region40: #{tpu_custom_call.1} parent=11 // pred_fallthru
          _
        // Predicated region
        $region41: #{tpu_custom_call.1} parent=11 // pred_check
          %p309 = pneg %p217
        $region42: #{tpu_custom_call.1} parent=11 // pred_check_branch
          %311 = sbr.rel (%p309) target = $region44
        $region43: #{tpu_custom_call.1} parent=11 // pred_region
          _
        $region44: #{tpu_custom_call.1} parent=11 // pred_fallthru
          _
      $region12: #{tpu_custom_call.1} parent=5 // pred_fallthru
        _
      %p312 = scmp.lt.s32.totalorder %s23, 2
      // Predicated region
      $region45: #{tpu_custom_call.1} parent=5 // pred_check
        %p313 = pneg %p312
      $region46: #{tpu_custom_call.1} parent=5 // pred_check_branch
        %315 = sbr.rel (%p313) target = $region48
      $region47: #{tpu_custom_call.1} parent=5 // pred_region
        // Predicated region
        $region49: #{tpu_custom_call.1} parent=47 // pred_check
          %p316 = pneg %p43
        $region50: #{tpu_custom_call.1} parent=47 // pred_check_branch
          %318 = sbr.rel (%p316) target = $region52
        $region51: #{tpu_custom_call.1} parent=47 // pred_region
          %s319 = sand.u32 %s33, 1
          %s320 = scalar_lea.sflag [#allocation4], %s319
          %s321 = sand.u32 %s33, 1
          %s322 = smul.addr %s321, 4
          %s323 = scalar_lea.vmem [#allocation3], %s322
          %s325 = ssub.s32 64, 64
          %326 = vsyncadd %s320, %s325
          %s327 = smul.addr %s23, 64
          %s328 = scalar_lea.hbm %s0, %s327
          %s330 = sshll.u32 %s323, 4
          %s331 = int_to_ptr.vmem [resolvable:$true] %s330
          %333 = dma.hbm_to_vmem [thread:$0]  %s328, 64, %s331, %s320
        $region52: #{tpu_custom_call.1} parent=47 // pred_fallthru
          _
      $region48: #{tpu_custom_call.1} parent=5 // pred_fallthru
        _
      %p334 = scmp.le.s32.totalorder 1, %s23
      %p335 = scmp.lt.s32.totalorder %s23, 3
      %p336 = pnand %p334, %p335
      %p337 = pneg %p336
      // Predicated region
      $region53: #{tpu_custom_call.1} parent=5 // pred_check
        _
      $region54: #{tpu_custom_call.1} parent=5 // pred_check_branch
        %339 = sbr.rel (%p336) target = $region56
      $region55: #{tpu_custom_call.1} parent=5 // pred_region
        %s340 = ssub.s32 %s23, 1
        %s341 = sand.u32 %s36, 1
        %s342 = scalar_lea.sflag [#allocation4], %s341
        %s343 = sand.u32 %s36, 1
        %s344 = smul.addr %s343, 4
        %s345 = scalar_lea.vmem [#allocation3], %s344
        // Predicated region
        $region57: #{tpu_custom_call.1} parent=55 // pred_check
          %p346 = pneg %p49
        $region58: #{tpu_custom_call.1} parent=55 // pred_check_branch
          %348 = sbr.rel (%p346) target = $region60
        $region59: #{tpu_custom_call.1} parent=55 // pred_region
          %349 = dma.done %s342, 64
        $region60: #{tpu_custom_call.1} parent=55 // pred_fallthru
          _
        // Predicated region
        $region61: #{tpu_custom_call.1} parent=55 // pred_check
          %p350 = pneg %p70
        $region62: #{tpu_custom_call.1} parent=55 // pred_check_branch
          %352 = sbr.rel (%p350) target = $region64
        $region63: #{tpu_custom_call.1} parent=55 // pred_region
          %353 = dma.done [#allocation7], 256
        $region64: #{tpu_custom_call.1} parent=55 // pred_fallthru
          _
        // Predicated region
        $region65: #{tpu_custom_call.1} parent=55 // pred_check
          %p354 = pneg %p112
        $region66: #{tpu_custom_call.1} parent=55 // pred_check_branch
          %356 = sbr.rel (%p354) target = $region68
        $region67: #{tpu_custom_call.1} parent=55 // pred_region
          %357 = dma.done [#allocation7], 256
        $region68: #{tpu_custom_call.1} parent=55 // pred_fallthru
          _
        // Predicated region
        $region69: #{tpu_custom_call.1} parent=55 // pred_check
          %p358 = pneg %p196
        $region70: #{tpu_custom_call.1} parent=55 // pred_check_branch
          %360 = sbr.rel (%p358) target = $region72
        $region71: #{tpu_custom_call.1} parent=55 // pred_region
          %361 = dma.done [#allocation10], 256
        $region72: #{tpu_custom_call.1} parent=55 // pred_fallthru
          _
        %s362 = sand.u32 %s36, 1
        %s363 = scalar_lea.sflag [#allocation4], %s362
        %s364 = sand.u32 %s36, 1
        %s365 = smul.addr %s364, 4
        %s366 = scalar_lea.vmem [#allocation3], %s365
        %p367 = pneg %p49
        %p368 = pneg %p46
        %p369 = pneg %p70
        %p370 = pneg %p67
        %p371 = pneg %p91
        %p372 = pneg %p88
        %p373 = pneg %p112
        %p374 = pneg %p109
        %p375 = pneg %p133
        %p376 = pneg %p130
        %p377 = pneg %p154
        %p378 = pneg %p151
        %p379 = pneg %p175
        %p380 = pneg %p172
        %p381 = pneg %p196
        %p382 = pneg %p193
        %p383 = pneg %p217
        %p384 = pneg %p214
        %p385 = pneg %p243
        %p386 = pneg %p240
        %s387 = sand.u32 %s230, 1
        %s388 = scalar_lea.sflag [#allocation5], %s387
        %s389 = sand.u32 %s230, 1
        %s390 = smul.addr %s389, 8
        %s391 = scalar_lea.vmem [#allocation11], %s390
        %v393 = vld [vmem:[%s345] sm:$0xf]
        %v394 = vld [vmem:[#allocation6] sm:$0xf]
        %v395 = vld [vmem:[#allocation6 + $0x4] sm:$0xf]
        %v396 = vld [vmem:[#allocation6 + $0x8] sm:$0xf]
        %v397 = vld [vmem:[#allocation6 + $0xc] sm:$0xf]
        %v398 = vld [vmem:[%s2] sm:$0x1]
        %v400 = vlaneseq
        %v401 = vshrl.u32 %v400, 7
        %v402 = vsub.s32 0, %v401
        %v403 = vrot.slane %v398, %v402
        %v409 = vunpack.c.l.b16 %v394
        %v410 = vunpack.c.l.b16 %v395
        %v411 = vunpack.c.l.b16 %v396
        %v412 = vunpack.c.l.b16 %v397
        %v413 = vpack.c.b16 %v410, %v409
        %v414 = vpack.c.b16 %v412, %v411
        %vm415 = vcmask 261120
        %v417 = vsel %vm415, %v393, 0
        %v420 = vsel %vm415, %v413, 0
        %v423 = vsel %vm415, %v414, 0
        %425 = vmatprep.subr.bf16.mxu0 0
        %426 = vmatpush1.bf16.xpose.msra.mxu0 %v420
        %427 = vmatprep.subr.bf16.mxu0 0
        %428 = vmatpush1.bf16.xpose.msra.mxu0 %v423
        %429 = vmatprep.subr.bf16.mxu0 0
        %430 = vmatpush1.bf16.xpose.msra.mxu0 0
        %431 = vmatprep.subr.bf16.mxu0 0
        %432 = vmatpush1.bf16.xpose.msra.mxu0 0
        %433 = vmatprep.subr.bf16.mxu0 0
        %434 = vmatpush1.bf16.xpose.msra.mxu0 0
        %435 = vmatprep.subr.bf16.mxu0 0
        %436 = vmatpush1.bf16.xpose.msra.mxu0 0
        %437 = vmatprep.subr.bf16.mxu0 0
        %438 = vmatpush1.bf16.xpose.msra.mxu0 0
        %439 = vmatprep.subr.bf16.mxu0 0
        %440 = vmatpush1.bf16.xpose.msra.mxu0 0
        %441 = vmatprep.subr.bf16.mxu0 0
        %442 = vmatpush1.bf16.xpose.msra.mxu0 0
        %443 = vmatprep.subr.bf16.mxu0 0
        %444 = vmatpush1.bf16.xpose.msra.mxu0 0
        %445 = vmatprep.subr.bf16.mxu0 0
        %446 = vmatpush1.bf16.xpose.msra.mxu0 0
        %447 = vmatprep.subr.bf16.mxu0 0
        %448 = vmatpush1.bf16.xpose.msra.mxu0 0
        %449 = vmatprep.subr.bf16.mxu0 0
        %450 = vmatpush1.bf16.xpose.msra.mxu0 0
        %451 = vmatprep.subr.bf16.mxu0 0
        %452 = vmatpush1.bf16.xpose.msra.mxu0 0
        %453 = vmatprep.subr.bf16.mxu0 0
        %454 = vmatpush1.bf16.xpose.msra.mxu0 0
        %455 = vmatprep.subr.bf16.mxu0 0
        %456 = vmatpush1.bf16.xpose.msra.mxu0 0
        %457 = vmatprep.mubr.bf16.mxu0 0
        %458 = vmatmul.mubr.bf16.gmra.mrb[0].mxu0 %v417
        %v459 = vpop.f32.mrb[0].mxu0
        %v460 = vadd.f32 %v403, %v459
        %v461 = vpop.f32.mrb[0].mxu0
        %v462 = vpop.f32.mrb[0].mxu0
        %v463 = vpop.f32.mrb[0].mxu0
        %464 = vdwg.mxu0
        %v465 = vld [vmem:[#allocation8] sm:$0xf]
        %v466 = vld [vmem:[#allocation8 + $0x4] sm:$0xf]
        %v467 = vld [vmem:[#allocation8 + $0x8] sm:$0xf]
        %v468 = vld [vmem:[#allocation8 + $0xc] sm:$0xf]
        %v469 = vld [vmem:[%s4] sm:$0x1]
        %v471 = vlaneseq
        %v472 = vshrl.u32 %v471, 7
        %v473 = vsub.s32 0, %v472
        %v474 = vrot.slane %v469, %v473
        %v480 = vunpack.c.l.b16 %v465
        %v481 = vunpack.c.l.b16 %v466
        %v482 = vunpack.c.l.b16 %v467
        %v483 = vunpack.c.l.b16 %v468
        %v484 = vpack.c.b16 %v481, %v480
        %v485 = vpack.c.b16 %v483, %v482
        %v487 = vsel %vm415, %v484, 0
        %v490 = vsel %vm415, %v485, 0
        %492 = vmatprep.subr.bf16.mxu0 0
        %493 = vmatpush1.bf16.xpose.msra.mxu0 %v487
        %494 = vmatprep.subr.bf16.mxu0 0
        %495 = vmatpush1.bf16.xpose.msra.mxu0 %v490
        %496 = vmatprep.subr.bf16.mxu0 0
        %497 = vmatpush1.bf16.xpose.msra.mxu0 0
        %498 = vmatprep.subr.bf16.mxu0 0
        %499 = vmatpush1.bf16.xpose.msra.mxu0 0
        %500 = vmatprep.subr.bf16.mxu0 0
        %501 = vmatpush1.bf16.xpose.msra.mxu0 0
        %502 = vmatprep.subr.bf16.mxu0 0
        %503 = vmatpush1.bf16.xpose.msra.mxu0 0
        %504 = vmatprep.subr.bf16.mxu0 0
        %505 = vmatpush1.bf16.xpose.msra.mxu0 0
        %506 = vmatprep.subr.bf16.mxu0 0
        %507 = vmatpush1.bf16.xpose.msra.mxu0 0
        %508 = vmatprep.subr.bf16.mxu0 0
        %509 = vmatpush1.bf16.xpose.msra.mxu0 0
        %510 = vmatprep.subr.bf16.mxu0 0
        %511 = vmatpush1.bf16.xpose.msra.mxu0 0
        %512 = vmatprep.subr.bf16.mxu0 0
        %513 = vmatpush1.bf16.xpose.msra.mxu0 0
        %514 = vmatprep.subr.bf16.mxu0 0
        %515 = vmatpush1.bf16.xpose.msra.mxu0 0
        %516 = vmatprep.subr.bf16.mxu0 0
        %517 = vmatpush1.bf16.xpose.msra.mxu0 0
        %518 = vmatprep.subr.bf16.mxu0 0
        %519 = vmatpush1.bf16.xpose.msra.mxu0 0
        %520 = vmatprep.subr.bf16.mxu0 0
        %521 = vmatpush1.bf16.xpose.msra.mxu0 0
        %522 = vmatprep.subr.bf16.mxu0 0
        %523 = vmatpush1.bf16.xpose.msra.mxu0 0
        %524 = vmatprep.mubr.bf16.mxu0 0
        %525 = vmatmul.mubr.bf16.gmra.mrb[0].mxu0 %v417
        %v526 = vpop.f32.mrb[0].mxu0
        %v527 = vadd.f32 %v474, %v526
        %v528 = vpop.f32.mrb[0].mxu0
        %v529 = vpop.f32.mrb[0].mxu0
        %v530 = vpop.f32.mrb[0].mxu0
        %531 = vdwg.mxu0
        %v532 = vld [vmem:[%s5] sm:$0xf]
        %v533 = vld [vmem:[%s5 + $0x4] sm:$0xf]
        %v534 = vld [vmem:[%s5 + $0x8] sm:$0xf]
        %v535 = vld [vmem:[%s5 + $0xc] sm:$0xf]
        %v536 = vld [vmem:[%s6] sm:$0x1]
        %v538 = vlaneseq
        %v539 = vshrl.u32 %v538, 7
        %v540 = vsub.s32 0, %v539
        %v541 = vrot.slane %v536, %v540
        %v547 = vunpack.c.l.b16 %v532
        %v548 = vunpack.c.l.b16 %v533
        %v549 = vunpack.c.l.b16 %v534
        %v550 = vunpack.c.l.b16 %v535
        %v551 = vpack.c.b16 %v548, %v547
        %v552 = vpack.c.b16 %v550, %v549
        %v554 = vsel %vm415, %v551, 0
        %v557 = vsel %vm415, %v552, 0
        %559 = vmatprep.subr.bf16.mxu0 0
        %560 = vmatpush1.bf16.xpose.msra.mxu0 %v554
        %561 = vmatprep.subr.bf16.mxu0 0
        %562 = vmatpush1.bf16.xpose.msra.mxu0 %v557
        %563 = vmatprep.subr.bf16.mxu0 0
        %564 = vmatpush1.bf16.xpose.msra.mxu0 0
        %565 = vmatprep.subr.bf16.mxu0 0
        %566 = vmatpush1.bf16.xpose.msra.mxu0 0
        %567 = vmatprep.subr.bf16.mxu0 0
        %568 = vmatpush1.bf16.xpose.msra.mxu0 0
        %569 = vmatprep.subr.bf16.mxu0 0
        %570 = vmatpush1.bf16.xpose.msra.mxu0 0
        %571 = vmatprep.subr.bf16.mxu0 0
        %572 = vmatpush1.bf16.xpose.msra.mxu0 0
        %573 = vmatprep.subr.bf16.mxu0 0
        %574 = vmatpush1.bf16.xpose.msra.mxu0 0
        %575 = vmatprep.subr.bf16.mxu0 0
        %576 = vmatpush1.bf16.xpose.msra.mxu0 0
        %577 = vmatprep.subr.bf16.mxu0 0
        %578 = vmatpush1.bf16.xpose.msra.mxu0 0
        %579 = vmatprep.subr.bf16.mxu0 0
        %580 = vmatpush1.bf16.xpose.msra.mxu0 0
        %581 = vmatprep.subr.bf16.mxu0 0
        %582 = vmatpush1.bf16.xpose.msra.mxu0 0
        %583 = vmatprep.subr.bf16.mxu0 0
        %584 = vmatpush1.bf16.xpose.msra.mxu0 0
        %585 = vmatprep.subr.bf16.mxu0 0
        %586 = vmatpush1.bf16.xpose.msra.mxu0 0
        %587 = vmatprep.subr.bf16.mxu0 0
        %588 = vmatpush1.bf16.xpose.msra.mxu0 0
        %589 = vmatprep.subr.bf16.mxu0 0
        %590 = vmatpush1.bf16.xpose.msra.mxu0 0
        %591 = vmatprep.mubr.bf16.mxu0 0
        %592 = vmatmul.mubr.bf16.gmra.mrb[0].mxu0 %v417
        %v593 = vpop.f32.mrb[0].mxu0
        %v594 = vadd.f32 %v541, %v593
        %v595 = vpop.f32.mrb[0].mxu0
        %v596 = vpop.f32.mrb[0].mxu0
        %v597 = vpop.f32.mrb[0].mxu0
        %598 = vdwg.mxu0
        %v599 = vpack.c.bf16 %v460, %v460
        %v600 = vpack.c.bf16 %v527, %v527
        %v601 = vpack.c.bf16 %v594, %v594
        %vm602 = vcmask 64512
        %v604 = vsel %vm602, %v599, 0
        %v607 = vsel %vm602, %v600, 0
        %609 = vmatprep.subr.bf16.mxu0 0
        %610 = vmatpush1.bf16.xpose.msra.mxu0 %v607
        %611 = vmatprep.subr.bf16.mxu0 0
        %612 = vmatpush1.bf16.xpose.msra.mxu0 0
        %613 = vmatprep.subr.bf16.mxu0 0
        %614 = vmatpush1.bf16.xpose.msra.mxu0 0
        %615 = vmatprep.subr.bf16.mxu0 0
        %616 = vmatpush1.bf16.xpose.msra.mxu0 0
        %617 = vmatprep.subr.bf16.mxu0 0
        %618 = vmatpush1.bf16.xpose.msra.mxu0 0
        %619 = vmatprep.subr.bf16.mxu0 0
        %620 = vmatpush1.bf16.xpose.msra.mxu0 0
        %621 = vmatprep.subr.bf16.mxu0 0
        %622 = vmatpush1.bf16.xpose.msra.mxu0 0
        %623 = vmatprep.subr.bf16.mxu0 0
        %624 = vmatpush1.bf16.xpose.msra.mxu0 0
        %625 = vmatprep.subr.bf16.mxu0 0
        %626 = vmatpush1.bf16.xpose.msra.mxu0 0
        %627 = vmatprep.subr.bf16.mxu0 0
        %628 = vmatpush1.bf16.xpose.msra.mxu0 0
        %629 = vmatprep.subr.bf16.mxu0 0
        %630 = vmatpush1.bf16.xpose.msra.mxu0 0
        %631 = vmatprep.subr.bf16.mxu0 0
        %632 = vmatpush1.bf16.xpose.msra.mxu0 0
        %633 = vmatprep.subr.bf16.mxu0 0
        %634 = vmatpush1.bf16.xpose.msra.mxu0 0
        %635 = vmatprep.subr.bf16.mxu0 0
        %636 = vmatpush1.bf16.xpose.msra.mxu0 0
        %637 = vmatprep.subr.bf16.mxu0 0
        %638 = vmatpush1.bf16.xpose.msra.mxu0 0
        %639 = vmatprep.subr.bf16.mxu0 0
        %640 = vmatpush1.bf16.xpose.msra.mxu0 0
        %641 = vmatprep.mubr.bf16.mxu0 0
        %642 = vmatmul.mubr.bf16.gmra.mrb[0].mxu0 %v604
        %v643 = vpop.f32.mrb[0].mxu0
        %v644 = vadd.f32 0.0, %v643
        %v645 = vpop.f32.mrb[0].mxu0
        %v646 = vpop.f32.mrb[0].mxu0
        %v647 = vpop.f32.mrb[0].mxu0
        %648 = vdwg.mxu0
        %v649 = vsel %vm602, %v644, -inf
        %650 = vmax.xlane.f32.xlu0 %v649
        %v651 = vpop.xlane.xlu0 %650
        %v652 = vsub.f32 %v644, %v651
        %v653 = vmul.f32 %v652, 1.442695
        %v654 = vpow.pop %v653
        %v655 = vsel %vm602, %v654, 0.0
        %656 = vadd.xlane.f32.xlu0 %v655
        %v657 = vpop.xlane.xlu0 %656
        %v658 = vrcp.pop %v657
        %v659 = vmul.f32 %v654, %v658
        %v660 = vpack.c.bf16 %v659, %v659
        %v662 = vsel %vm602, %v660, 0
        %vm664 = vcmask 1043456
        %v666 = vsel %vm664, %v601, 0
        %668 = vmatprep.subr.bf16.mxu0 0
        %669 = vmatpush1.bf16.msra.mxu0 %v666
        %670 = vmatprep.subr.bf16.mxu0 0
        %671 = vmatpush1.bf16.msra.mxu0 0
        %672 = vmatprep.subr.bf16.mxu0 0
        %673 = vmatpush1.bf16.msra.mxu0 0
        %674 = vmatprep.subr.bf16.mxu0 0
        %675 = vmatpush1.bf16.msra.mxu0 0
        %676 = vmatprep.subr.bf16.mxu0 0
        %677 = vmatpush1.bf16.msra.mxu0 0
        %678 = vmatprep.subr.bf16.mxu0 0
        %679 = vmatpush1.bf16.msra.mxu0 0
        %680 = vmatprep.subr.bf16.mxu0 0
        %681 = vmatpush1.bf16.msra.mxu0 0
        %682 = vmatprep.subr.bf16.mxu0 0
        %683 = vmatpush1.bf16.msra.mxu0 0
        %684 = vmatprep.subr.bf16.mxu0 0
        %685 = vmatpush1.bf16.msra.mxu0 0
        %686 = vmatprep.subr.bf16.mxu0 0
        %687 = vmatpush1.bf16.msra.mxu0 0
        %688 = vmatprep.subr.bf16.mxu0 0
        %689 = vmatpush1.bf16.msra.mxu0 0
        %690 = vmatprep.subr.bf16.mxu0 0
        %691 = vmatpush1.bf16.msra.mxu0 0
        %692 = vmatprep.subr.bf16.mxu0 0
        %693 = vmatpush1.bf16.msra.mxu0 0
        %694 = vmatprep.subr.bf16.mxu0 0
        %695 = vmatpush1.bf16.msra.mxu0 0
        %696 = vmatprep.subr.bf16.mxu0 0
        %697 = vmatpush1.bf16.msra.mxu0 0
        %698 = vmatprep.subr.bf16.mxu0 0
        %699 = vmatpush1.bf16.msra.mxu0 0
        %700 = vmatprep.mubr.bf16.mxu0 0
        %701 = vmatmul.mubr.bf16.gmra.mrb[0].mxu0 %v662
        %v702 = vpop.f32.mrb[0].mxu0
        %v703 = vadd.f32 0.0, %v702
        %v704 = vpop.f32.mrb[0].mxu0
        %v705 = vpop.f32.mrb[0].mxu0
        %v706 = vpop.f32.mrb[0].mxu0
        %707 = vdwg.mxu0
        %v708 = vpack.c.bf16 %v703, %v703
        %vm709 = vcmask 60416
        %710 = vst.msk [vmem:[#allocation2] sm:$0xf] %vm709, %v708
        %712 = vrot.lane.b32.xlu0 %v599, 120
        %v713 = vpop.permute.xlu0 %712
        %715 = vrot.lane.b32.xlu0 %v600, 120
        %v716 = vpop.permute.xlu0 %715
        %v718 = vsel %vm602, %v713, 0
        %v721 = vsel %vm602, %v716, 0
        %723 = vmatprep.subr.bf16.mxu0 0
        %724 = vmatpush1.bf16.xpose.msra.mxu0 %v721
        %725 = vmatprep.subr.bf16.mxu0 0
        %726 = vmatpush1.bf16.xpose.msra.mxu0 0
        %727 = vmatprep.subr.bf16.mxu0 0
        %728 = vmatpush1.bf16.xpose.msra.mxu0 0
        %729 = vmatprep.subr.bf16.mxu0 0
        %730 = vmatpush1.bf16.xpose.msra.mxu0 0
        %731 = vmatprep.subr.bf16.mxu0 0
        %732 = vmatpush1.bf16.xpose.msra.mxu0 0
        %733 = vmatprep.subr.bf16.mxu0 0
        %734 = vmatpush1.bf16.xpose.msra.mxu0 0
        %735 = vmatprep.subr.bf16.mxu0 0
        %736 = vmatpush1.bf16.xpose.msra.mxu0 0
        %737 = vmatprep.subr.bf16.mxu0 0
        %738 = vmatpush1.bf16.xpose.msra.mxu0 0
        %739 = vmatprep.subr.bf16.mxu0 0
        %740 = vmatpush1.bf16.xpose.msra.mxu0 0
        %741 = vmatprep.subr.bf16.mxu0 0
        %742 = vmatpush1.bf16.xpose.msra.mxu0 0
        %743 = vmatprep.subr.bf16.mxu0 0
        %744 = vmatpush1.bf16.xpose.msra.mxu0 0
        %745 = vmatprep.subr.bf16.mxu0 0
        %746 = vmatpush1.bf16.xpose.msra.mxu0 0
        %747 = vmatprep.subr.bf16.mxu0 0
        %748 = vmatpush1.bf16.xpose.msra.mxu0 0
        %749 = vmatprep.subr.bf16.mxu0 0
        %750 = vmatpush1.bf16.xpose.msra.mxu0 0
        %751 = vmatprep.subr.bf16.mxu0 0
        %752 = vmatpush1.bf16.xpose.msra.mxu0 0
        %753 = vmatprep.subr.bf16.mxu0 0
        %754 = vmatpush1.bf16.xpose.msra.mxu0 0
        %755 = vmatprep.mubr.bf16.mxu0 0
        %756 = vmatmul.mubr.bf16.gmra.mrb[0].mxu0 %v718
        %v757 = vpop.f32.mrb[0].mxu0
        %v758 = vadd.f32 0.0, %v757
        %v759 = vpop.f32.mrb[0].mxu0
        %v760 = vpop.f32.mrb[0].mxu0
        %v761 = vpop.f32.mrb[0].mxu0
        %762 = vdwg.mxu0
        %v763 = vsel %vm602, %v758, -inf
        %764 = vmax.xlane.f32.xlu0 %v763
        %v765 = vpop.xlane.xlu0 %764
        %v766 = vsub.f32 %v758, %v765
        %v767 = vmul.f32 %v766, 1.442695
        %v768 = vpow.pop %v767
        %v769 = vsel %vm602, %v768, 0.0
        %770 = vadd.xlane.f32.xlu0 %v769
        %v771 = vpop.xlane.xlu0 %770
        %v772 = vrcp.pop %v771
        %v773 = vmul.f32 %v768, %v772
        %v774 = vpack.c.bf16 %v773, %v773
        %776 = vrot.lane.b32.xlu0 %v601, 120
        %v777 = vpop.permute.xlu0 %776
        %v779 = vsel %vm602, %v774, 0
        %v782 = vsel %vm664, %v777, 0
        %784 = vmatprep.subr.bf16.mxu0 0
        %785 = vmatpush1.bf16.msra.mxu0 %v782
        %786 = vmatprep.subr.bf16.mxu0 0
        %787 = vmatpush1.bf16.msra.mxu0 0
        %788 = vmatprep.subr.bf16.mxu0 0
        %789 = vmatpush1.bf16.msra.mxu0 0
        %790 = vmatprep.subr.bf16.mxu0 0
        %791 = vmatpush1.bf16.msra.mxu0 0
        %792 = vmatprep.subr.bf16.mxu0 0
        %793 = vmatpush1.bf16.msra.mxu0 0
        %794 = vmatprep.subr.bf16.mxu0 0
        %795 = vmatpush1.bf16.msra.mxu0 0
        %796 = vmatprep.subr.bf16.mxu0 0
        %797 = vmatpush1.bf16.msra.mxu0 0
        %798 = vmatprep.subr.bf16.mxu0 0
        %799 = vmatpush1.bf16.msra.mxu0 0
        %800 = vmatprep.subr.bf16.mxu0 0
        %801 = vmatpush1.bf16.msra.mxu0 0
        %802 = vmatprep.subr.bf16.mxu0 0
        %803 = vmatpush1.bf16.msra.mxu0 0
        %804 = vmatprep.subr.bf16.mxu0 0
        %805 = vmatpush1.bf16.msra.mxu0 0
        %806 = vmatprep.subr.bf16.mxu0 0
        %807 = vmatpush1.bf16.msra.mxu0 0
        %808 = vmatprep.subr.bf16.mxu0 0
        %809 = vmatpush1.bf16.msra.mxu0 0
        %810 = vmatprep.subr.bf16.mxu0 0
        %811 = vmatpush1.bf16.msra.mxu0 0
        %812 = vmatprep.subr.bf16.mxu0 0
        %813 = vmatpush1.bf16.msra.mxu0 0
        %814 = vmatprep.subr.bf16.mxu0 0
        %815 = vmatpush1.bf16.msra.mxu0 0
        %816 = vmatprep.mubr.bf16.mxu0 0
        %817 = vmatmul.mubr.bf16.gmra.mrb[0].mxu0 %v779
        %v818 = vpop.f32.mrb[0].mxu0
        %v819 = vadd.f32 0.0, %v818
        %v820 = vpop.f32.mrb[0].mxu0
        %v821 = vpop.f32.mrb[0].mxu0
        %v822 = vpop.f32.mrb[0].mxu0
        %823 = vdwg.mxu0
        %v824 = vpack.c.bf16 %v819, %v819
        %v826 = vunpack.c.l.b16 %v824
        %v827 = vpack.c.b16 %v826, %v826
        %828 = vrot.lane.b32.xlu0 %v827, 8
        %v829 = vpop.permute.xlu0 %828
        %vm831 = vcmask 126016
        %832 = vst.msk [vmem:[#allocation2] sm:$0xf] %vm831, %v829
        %833 = vrot.lane.b32.xlu0 %v599, 112
        %v834 = vpop.permute.xlu0 %833
        %835 = vrot.lane.b32.xlu0 %v600, 112
        %v836 = vpop.permute.xlu0 %835
        %v838 = vsel %vm602, %v834, 0
        %v841 = vsel %vm602, %v836, 0
        %843 = vmatprep.subr.bf16.mxu0 0
        %844 = vmatpush1.bf16.xpose.msra.mxu0 %v841
        %845 = vmatprep.subr.bf16.mxu0 0
        %846 = vmatpush1.bf16.xpose.msra.mxu0 0
        %847 = vmatprep.subr.bf16.mxu0 0
        %848 = vmatpush1.bf16.xpose.msra.mxu0 0
        %849 = vmatprep.subr.bf16.mxu0 0
        %850 = vmatpush1.bf16.xpose.msra.mxu0 0
        %851 = vmatprep.subr.bf16.mxu0 0
        %852 = vmatpush1.bf16.xpose.msra.mxu0 0
        %853 = vmatprep.subr.bf16.mxu0 0
        %854 = vmatpush1.bf16.xpose.msra.mxu0 0
        %855 = vmatprep.subr.bf16.mxu0 0
        %856 = vmatpush1.bf16.xpose.msra.mxu0 0
        %857 = vmatprep.subr.bf16.mxu0 0
        %858 = vmatpush1.bf16.xpose.msra.mxu0 0
        %859 = vmatprep.subr.bf16.mxu0 0
        %860 = vmatpush1.bf16.xpose.msra.mxu0 0
        %861 = vmatprep.subr.bf16.mxu0 0
        %862 = vmatpush1.bf16.xpose.msra.mxu0 0
        %863 = vmatprep.subr.bf16.mxu0 0
        %864 = vmatpush1.bf16.xpose.msra.mxu0 0
        %865 = vmatprep.subr.bf16.mxu0 0
        %866 = vmatpush1.bf16.xpose.msra.mxu0 0
        %867 = vmatprep.subr.bf16.mxu0 0
        %868 = vmatpush1.bf16.xpose.msra.mxu0 0
        %869 = vmatprep.subr.bf16.mxu0 0
        %870 = vmatpush1.bf16.xpose.msra.mxu0 0
        %871 = vmatprep.subr.bf16.mxu0 0
        %872 = vmatpush1.bf16.xpose.msra.mxu0 0
        %873 = vmatprep.subr.bf16.mxu0 0
        %874 = vmatpush1.bf16.xpose.msra.mxu0 0
        %875 = vmatprep.mubr.bf16.mxu0 0
        %876 = vmatmul.mubr.bf16.gmra.mrb[0].mxu0 %v838
        %v877 = vpop.f32.mrb[0].mxu0
        %v878 = vadd.f32 0.0, %v877
        %v879 = vpop.f32.mrb[0].mxu0
        %v880 = vpop.f32.mrb[0].mxu0
        %v881 = vpop.f32.mrb[0].mxu0
        %882 = vdwg.mxu0
        %v883 = vsel %vm602, %v878, -inf
        %884 = vmax.xlane.f32.xlu0 %v883
        %v885 = vpop.xlane.xlu0 %884
        %v886 = vsub.f32 %v878, %v885
        %v887 = vmul.f32 %v886, 1.442695
        %v888 = vpow.pop %v887
        %v889 = vsel %vm602, %v888, 0.0
        %890 = vadd.xlane.f32.xlu0 %v889
        %v891 = vpop.xlane.xlu0 %890
        %v892 = vrcp.pop %v891
        %v893 = vmul.f32 %v888, %v892
        %v894 = vpack.c.bf16 %v893, %v893
        %895 = vrot.lane.b32.xlu0 %v601, 112
        %v896 = vpop.permute.xlu0 %895
        %v898 = vsel %vm602, %v894, 0
        %v901 = vsel %vm664, %v896, 0
        %903 = vmatprep.subr.bf16.mxu0 0
        %904 = vmatpush1.bf16.msra.mxu0 %v901
        %905 = vmatprep.subr.bf16.mxu0 0
        %906 = vmatpush1.bf16.msra.mxu0 0
        %907 = vmatprep.subr.bf16.mxu0 0
        %908 = vmatpush1.bf16.msra.mxu0 0
        %909 = vmatprep.subr.bf16.mxu0 0
        %910 = vmatpush1.bf16.msra.mxu0 0
        %911 = vmatprep.subr.bf16.mxu0 0
        %912 = vmatpush1.bf16.msra.mxu0 0
        %913 = vmatprep.subr.bf16.mxu0 0
        %914 = vmatpush1.bf16.msra.mxu0 0
        %915 = vmatprep.subr.bf16.mxu0 0
        %916 = vmatpush1.bf16.msra.mxu0 0
        %917 = vmatprep.subr.bf16.mxu0 0
        %918 = vmatpush1.bf16.msra.mxu0 0
        %919 = vmatprep.subr.bf16.mxu0 0
        %920 = vmatpush1.bf16.msra.mxu0 0
        %921 = vmatprep.subr.bf16.mxu0 0
        %922 = vmatpush1.bf16.msra.mxu0 0
        %923 = vmatprep.subr.bf16.mxu0 0
        %924 = vmatpush1.bf16.msra.mxu0 0
        %925 = vmatprep.subr.bf16.mxu0 0
        %926 = vmatpush1.bf16.msra.mxu0 0
        %927 = vmatprep.subr.bf16.mxu0 0
        %928 = vmatpush1.bf16.msra.mxu0 0
        %929 = vmatprep.subr.bf16.mxu0 0
        %930 = vmatpush1.bf16.msra.mxu0 0
        %931 = vmatprep.subr.bf16.mxu0 0
        %932 = vmatpush1.bf16.msra.mxu0 0
        %933 = vmatprep.subr.bf16.mxu0 0
        %934 = vmatpush1.bf16.msra.mxu0 0
        %935 = vmatprep.mubr.bf16.mxu0 0
        %936 = vmatmul.mubr.bf16.gmra.mrb[0].mxu0 %v898
        %v937 = vpop.f32.mrb[0].mxu0
        %v938 = vadd.f32 0.0, %v937
        %v939 = vpop.f32.mrb[0].mxu0
        %v940 = vpop.f32.mrb[0].mxu0
        %v941 = vpop.f32.mrb[0].mxu0
        %942 = vdwg.mxu0
        %v943 = vpack.c.bf16 %v938, %v938
        %v945 = vunpack.c.l.b16 %v943
        %v946 = vpack.c.b16 %v945, %v945
        %947 = vrot.lane.b32.xlu0 %v946, 16
        %v948 = vpop.permute.xlu0 %947
        %vm950 = vcmask 191616
        %951 = vst.msk [vmem:[#allocation2] sm:$0xf] %vm950, %v948
        %952 = vrot.lane.b32.xlu0 %v599, 104
        %v953 = vpop.permute.xlu0 %952
        %954 = vrot.lane.b32.xlu0 %v600, 104
        %v955 = vpop.permute.xlu0 %954
        %v957 = vsel %vm602, %v953, 0
        %v960 = vsel %vm602, %v955, 0
        %962 = vmatprep.subr.bf16.mxu0 0
        %963 = vmatpush1.bf16.xpose.msra.mxu0 %v960
        %964 = vmatprep.subr.bf16.mxu0 0
        %965 = vmatpush1.bf16.xpose.msra.mxu0 0
        %966 = vmatprep.subr.bf16.mxu0 0
        %967 = vmatpush1.bf16.xpose.msra.mxu0 0
        %968 = vmatprep.subr.bf16.mxu0 0
        %969 = vmatpush1.bf16.xpose.msra.mxu0 0
        %970 = vmatprep.subr.bf16.mxu0 0
        %971 = vmatpush1.bf16.xpose.msra.mxu0 0
        %972 = vmatprep.subr.bf16.mxu0 0
        %973 = vmatpush1.bf16.xpose.msra.mxu0 0
        %974 = vmatprep.subr.bf16.mxu0 0
        %975 = vmatpush1.bf16.xpose.msra.mxu0 0
        %976 = vmatprep.subr.bf16.mxu0 0
        %977 = vmatpush1.bf16.xpose.msra.mxu0 0
        %978 = vmatprep.subr.bf16.mxu0 0
        %979 = vmatpush1.bf16.xpose.msra.mxu0 0
        %980 = vmatprep.subr.bf16.mxu0 0
        %981 = vmatpush1.bf16.xpose.msra.mxu0 0
        %982 = vmatprep.subr.bf16.mxu0 0
        %983 = vmatpush1.bf16.xpose.msra.mxu0 0
        %984 = vmatprep.subr.bf16.mxu0 0
        %985 = vmatpush1.bf16.xpose.msra.mxu0 0
        %986 = vmatprep.subr.bf16.mxu0 0
        %987 = vmatpush1.bf16.xpose.msra.mxu0 0
        %988 = vmatprep.subr.bf16.mxu0 0
        %989 = vmatpush1.bf16.xpose.msra.mxu0 0
        %990 = vmatprep.subr.bf16.mxu0 0
        %991 = vmatpush1.bf16.xpose.msra.mxu0 0
        %992 = vmatprep.subr.bf16.mxu0 0
        %993 = vmatpush1.bf16.xpose.msra.mxu0 0
        %994 = vmatprep.mubr.bf16.mxu0 0
        %995 = vmatmul.mubr.bf16.gmra.mrb[0].mxu0 %v957
        %v996 = vpop.f32.mrb[0].mxu0
        %v997 = vadd.f32 0.0, %v996
        %v998 = vpop.f32.mrb[0].mxu0
        %v999 = vpop.f32.mrb[0].mxu0
        %v1000 = vpop.f32.mrb[0].mxu0
        %1001 = vdwg.mxu0
        %v1002 = vsel %vm602, %v997, -inf
        %1003 = vmax.xlane.f32.xlu0 %v1002
        %v1004 = vpop.xlane.xlu0 %1003
        %v1005 = vsub.f32 %v997, %v1004
        %v1006 = vmul.f32 %v1005, 1.442695
        %v1007 = vpow.pop %v1006
        %v1008 = vsel %vm602, %v1007, 0.0
        %1009 = vadd.xlane.f32.xlu0 %v1008
        %v1010 = vpop.xlane.xlu0 %1009
        %v1011 = vrcp.pop %v1010
        %v1012 = vmul.f32 %v1007, %v1011
        %v1013 = vpack.c.bf16 %v1012, %v1012
        %1014 = vrot.lane.b32.xlu0 %v601, 104
        %v1015 = vpop.permute.xlu0 %1014
        %v1017 = vsel %vm602, %v1013, 0
        %v1020 = vsel %vm664, %v1015, 0
        %1022 = vmatprep.subr.bf16.mxu0 0
        %1023 = vmatpush1.bf16.msra.mxu0 %v1020
        %1024 = vmatprep.subr.bf16.mxu0 0
        %1025 = vmatpush1.bf16.msra.mxu0 0
        %1026 = vmatprep.subr.bf16.mxu0 0
        %1027 = vmatpush1.bf16.msra.mxu0 0
        %1028 = vmatprep.subr.bf16.mxu0 0
        %1029 = vmatpush1.bf16.msra.mxu0 0
        %1030 = vmatprep.subr.bf16.mxu0 0
        %1031 = vmatpush1.bf16.msra.mxu0 0
        %1032 = vmatprep.subr.bf16.mxu0 0
        %1033 = vmatpush1.bf16.msra.mxu0 0
        %1034 = vmatprep.subr.bf16.mxu0 0
        %1035 = vmatpush1.bf16.msra.mxu0 0
        %1036 = vmatprep.subr.bf16.mxu0 0
        %1037 = vmatpush1.bf16.msra.mxu0 0
        %1038 = vmatprep.subr.bf16.mxu0 0
        %1039 = vmatpush1.bf16.msra.mxu0 0
        %1040 = vmatprep.subr.bf16.mxu0 0
        %1041 = vmatpush1.bf16.msra.mxu0 0
        %1042 = vmatprep.subr.bf16.mxu0 0
        %1043 = vmatpush1.bf16.msra.mxu0 0
        %1044 = vmatprep.subr.bf16.mxu0 0
        %1045 = vmatpush1.bf16.msra.mxu0 0
        %1046 = vmatprep.subr.bf16.mxu0 0
        %1047 = vmatpush1.bf16.msra.mxu0 0
        %1048 = vmatprep.subr.bf16.mxu0 0
        %1049 = vmatpush1.bf16.msra.mxu0 0
        %1050 = vmatprep.subr.bf16.mxu0 0
        %1051 = vmatpush1.bf16.msra.mxu0 0
        %1052 = vmatprep.subr.bf16.mxu0 0
        %1053 = vmatpush1.bf16.msra.mxu0 0
        %1054 = vmatprep.mubr.bf16.mxu0 0
        %1055 = vmatmul.mubr.bf16.gmra.mrb[0].mxu0 %v1017
        %v1056 = vpop.f32.mrb[0].mxu0
        %v1057 = vadd.f32 0.0, %v1056
        %v1058 = vpop.f32.mrb[0].mxu0
        %v1059 = vpop.f32.mrb[0].mxu0
        %v1060 = vpop.f32.mrb[0].mxu0
        %1061 = vdwg.mxu0
        %v1062 = vpack.c.bf16 %v1057, %v1057
        %v1064 = vunpack.c.l.b16 %v1062
        %v1065 = vpack.c.b16 %v1064, %v1064
        %1066 = vrot.lane.b32.xlu0 %v1065, 24
        %v1067 = vpop.permute.xlu0 %1066
        %vm1069 = vcmask 257216
        %1070 = vst.msk [vmem:[#allocation2] sm:$0xf] %vm1069, %v1067
        %v1071 = vld [vmem:[#allocation2] sm:$0xf]
        %v1072 = vld [vmem:[#allocation9] sm:$0xf]
        %v1073 = vld [vmem:[#allocation9 + $0x4] sm:$0xf]
        %v1074 = vld [vmem:[#allocation9 + $0x8] sm:$0xf]
        %v1075 = vld [vmem:[#allocation9 + $0xc] sm:$0xf]
        %v1076 = vld [vmem:[%s8] sm:$0x1]
        %v1078 = vlaneseq
        %v1079 = vshrl.u32 %v1078, 7
        %v1080 = vsub.s32 0, %v1079
        %v1081 = vrot.slane %v1076, %v1080
        %v1087 = vunpack.c.l.b16 %v1072
        %v1088 = vunpack.c.l.b16 %v1073
        %v1089 = vunpack.c.l.b16 %v1074
        %v1090 = vunpack.c.l.b16 %v1075
        %v1091 = vpack.c.b16 %v1088, %v1087
        %v1092 = vpack.c.b16 %v1090, %v1089
        %v1094 = vsel %vm415, %v1071, 0
        %v1097 = vsel %vm415, %v1091, 0
        %v1100 = vsel %vm415, %v1092, 0
        %1102 = vmatprep.subr.bf16.mxu0 0
        %1103 = vmatpush1.bf16.xpose.msra.mxu0 %v1097
        %1104 = vmatprep.subr.bf16.mxu0 0
        %1105 = vmatpush1.bf16.xpose.msra.mxu0 %v1100
        %1106 = vmatprep.subr.bf16.mxu0 0
        %1107 = vmatpush1.bf16.xpose.msra.mxu0 0
        %1108 = vmatprep.subr.bf16.mxu0 0
        %1109 = vmatpush1.bf16.xpose.msra.mxu0 0
        %1110 = vmatprep.subr.bf16.mxu0 0
        %1111 = vmatpush1.bf16.xpose.msra.mxu0 0
        %1112 = vmatprep.subr.bf16.mxu0 0
        %1113 = vmatpush1.bf16.xpose.msra.mxu0 0
        %1114 = vmatprep.subr.bf16.mxu0 0
        %1115 = vmatpush1.bf16.xpose.msra.mxu0 0
        %1116 = vmatprep.subr.bf16.mxu0 0
        %1117 = vmatpush1.bf16.xpose.msra.mxu0 0
        %1118 = vmatprep.subr.bf16.mxu0 0
        %1119 = vmatpush1.bf16.xpose.msra.mxu0 0
        %1120 = vmatprep.subr.bf16.mxu0 0
        %1121 = vmatpush1.bf16.xpose.msra.mxu0 0
        %1122 = vmatprep.subr.bf16.mxu0 0
        %1123 = vmatpush1.bf16.xpose.msra.mxu0 0
        %1124 = vmatprep.subr.bf16.mxu0 0
        %1125 = vmatpush1.bf16.xpose.msra.mxu0 0
        %1126 = vmatprep.subr.bf16.mxu0 0
        %1127 = vmatpush1.bf16.xpose.msra.mxu0 0
        %1128 = vmatprep.subr.bf16.mxu0 0
        %1129 = vmatpush1.bf16.xpose.msra.mxu0 0
        %1130 = vmatprep.subr.bf16.mxu0 0
        %1131 = vmatpush1.bf16.xpose.msra.mxu0 0
        %1132 = vmatprep.subr.bf16.mxu0 0
        %1133 = vmatpush1.bf16.xpose.msra.mxu0 0
        %1134 = vmatprep.mubr.bf16.mxu0 0
        %1135 = vmatmul.mubr.bf16.gmra.mrb[0].mxu0 %v1094
        %v1136 = vpop.f32.mrb[0].mxu0
        %v1137 = vadd.f32 %v1081, %v1136
        %v1138 = vpop.f32.mrb[0].mxu0
        %v1139 = vpop.f32.mrb[0].mxu0
        %v1140 = vpop.f32.mrb[0].mxu0
        %1141 = vdwg.mxu0
        %1142 = vst.msk [vmem:[%s391] sm:$0xff] %vm415, %v1137
        %s1143 = sand.u32 %s230, 1
        %s1144 = scalar_lea.sflag [#allocation5], %s1143
        %s1145 = sand.u32 %s230, 1
        %s1146 = smul.addr %s1145, 8
        %s1147 = scalar_lea.vmem [#allocation11], %s1146
        // Predicated region
        $region73: #{tpu_custom_call.1} parent=55 // pred_check
          %p1148 = pneg %p240
        $region74: #{tpu_custom_call.1} parent=55 // pred_check_branch
          %1150 = sbr.rel (%p1148) target = $region76
        $region75: #{tpu_custom_call.1} parent=55 // pred_region
          %s1152 = ssub.s32 128, 128
          %1153 = vsyncadd %s1144, %s1152
          %s1154 = smul.addr %s28, 128
          %s1155 = scalar_lea.hbm %s9, %s1154
          %s1157 = sshll.u32 %s1147, 4
          %s1158 = int_to_ptr.vmem [resolvable:$true] %s1157
          %1160 = dma.vmem_to_hbm [thread:$0]  %s1158, 128, %s1155, %s1144
        $region76: #{tpu_custom_call.1} parent=55 // pred_fallthru
          _
      $region56: #{tpu_custom_call.1} parent=5 // pred_fallthru
        _
      %p1161 = scmp.le.s32.totalorder 2, %s23
      // Predicated region
      $region77: #{tpu_custom_call.1} parent=5 // pred_check
        %p1162 = pneg %p1161
      $region78: #{tpu_custom_call.1} parent=5 // pred_check_branch
        %1164 = sbr.rel (%p1162) target = $region80
      $region79: #{tpu_custom_call.1} parent=5 // pred_region
        %s1165 = ssub.s32 %s23, 2
        // Predicated region
        $region81: #{tpu_custom_call.1} parent=79 // pred_check
          %p1166 = pneg %p246
        $region82: #{tpu_custom_call.1} parent=79 // pred_check_branch
          %1168 = sbr.rel (%p1166) target = $region84
        $region83: #{tpu_custom_call.1} parent=79 // pred_region
          %s1169 = sand.u32 %s231, 1
          %s1170 = scalar_lea.sflag [#allocation5], %s1169
          %s1171 = sand.u32 %s231, 1
          %s1172 = smul.addr %s1171, 8
          %s1173 = scalar_lea.vmem [#allocation11], %s1172
          %1174 = dma.done %s1170, 128
        $region84: #{tpu_custom_call.1} parent=79 // pred_fallthru
          _
      $region80: #{tpu_custom_call.1} parent=5 // pred_fallthru
        _
    $region6: #{tpu_custom_call.1} parent=1 // loop_footer
      %s27 = sadd.s32 1, %s23
    $region7: #{tpu_custom_call.1} parent=1 // loop_footer_branch
      %22 = sbr.rel target = $region3
    $region8: #{tpu_custom_call.1} parent=1 // loop_exit
      _
    %1175 = vsyncpa [#allocation4], 1
    %s1176 = scalar_lea.sflag [#allocation4], 1
    %1177 = vsyncpa %s1176, 1
    %1178 = vsyncpa [#allocation7], 1
    %1179 = vsyncpa [#allocation10], 1
    %1180 = vsyncpa [#allocation5], 1
    %s1181 = scalar_lea.sflag [#allocation5], 1
    %1182 = vsyncpa %s1181, 1

</llo_original>
